<compile_context>
chip_gen: v7x
topology: tpu7x:2x2x1
jax: 0.10.0
libtpu: 0.0.40
codegen_flags: <defaults>
</compile_context>

<pallas_src>
import numpy as np

import jax
import jax.numpy as jnp
from jax import lax
from jax.experimental import pallas as pl
from jax.experimental.pallas import tpu as pltpu

EPS = 1e-5          # torch.nn.BatchNorm2d default eps
C_OUT = 8
N_STAGES = 7

# binop per stage: +, *, -, +, /, *, -   (matches the torch forward)
BINOPS = [jnp.add, jnp.multiply, jnp.subtract, jnp.add,
          jnp.divide, jnp.multiply, jnp.subtract]


# ----------------------------- static planning -------------------------------
def _next_hw(h):
    # Conv2d(k=1, stride=2, padding=1) output size
    return (h + 1) // 2 + 1


def stage_dims(H, W):
    """Spatial dims of the activation entering each stage's conv
    (i.e. AFTER that stage's stride-2/pad-1 subsample)."""
    dims = [(_next_hw(H), _next_hw(W))]
    for _ in range(1, N_STAGES):
        h, w = dims[-1]
        dims.append((_next_hw(h), _next_hw(w)))
    return dims


def make_select(N, Hi, Wi, Ho, Wo):
    """0/1 gather matrix (N*Hi*Wi, N*Ho*Wo): output pixel (ho,wo) reads input
    (2ho-1, 2wo-1); out-of-range positions stay as all-zero columns (padding)."""
    S = np.zeros((N * Hi * Wi, N * Ho * Wo), np.float32)
    for n in range(N):
        for ho in range(Ho):
            hi = 2 * ho - 1
            if not (0 <= hi < Hi):
                continue
            for wo in range(Wo):
                wi = 2 * wo - 1
                if not (0 <= wi < Wi):
                    continue
                S[n * Hi * Wi + hi * Wi + wi, n * Ho * Wo + ho * Wo + wo] = 1.0
    return S


def build_sel_pack(N, dims):
    """Pack every needed per-stage gather matrix into ONE buffer (8-row aligned
    blocks) and return static per-stage metadata for the kernel."""
    meta = {}
    blocks = []
    row = 0
    max_cols = 8
    for s in range(1, N_STAGES):
        (Hi, Wi), (Ho, Wo) = dims[s - 1], dims[s]
        if (Hi, Wi) == (Ho, Wo):
            # spatial fixed point: the subsample keeps only pixel (1,1) of each
            # image, in place -> VPU lane mask, no matmul, no DMA.
            meta[s] = ("mask", Hi * Wi, Wi + 1)
        else:
            S = make_select(N, Hi, Wi, Ho, Wo)
            pin, pout = S.shape
            pin_pad = -(-pin // 8) * 8            # keep block offsets 8-aligned
            Sp = np.zeros((pin_pad, pout), np.float32)
            Sp[:pin] = S
            meta[s] = ("dot", row, pin, pout)
            blocks.append(Sp)
            row += pin_pad
            max_cols = max(max_cols, pout)
    if blocks:
        packed = np.zeros((row, max_cols), np.float32)
        r = 0
        for B in blocks:
            packed[r:r + B.shape[0], :B.shape[1]] = B
            r += B.shape[0]
    else:
        packed = np.zeros((8, 8), np.float32)     # dummy, never read
    return jnp.asarray(packed), meta


# ----------------------------- Pallas kernel ---------------------------------
def make_kernel(meta):
    """meta[s] is static: ('mask', per_image_pixels, keep_col) or
    ('dot', row_offset, P_in, P_out) into the packed sel buffer."""
    def kernel(x_ref, w_ref, scal_ref, sel_ref, o_ref):
        # x: (8, P) channels-on-sublane, pixels-on-lane (p = n*H*W + h*W + w)
        x = x_ref[...]
        for s in range(N_STAGES):
            if s > 0:
                m = meta[s]
                if m[0] == "mask":
                    hw, keep = m[1], m[2]
                    col = lax.broadcasted_iota(jnp.int32, x.shape, 1)
                    x = jnp.where((col % hw) == keep, x, 0.0)
                else:
                    _, r0, pin, pout = m
                    sel = sel_ref[r0:r0 + pin, 0:pout]
                    x = jnp.dot(x, sel, preferred_element_type=jnp.float32)
            # both convs of the stage in one MXU matmul -> (16, P_s)
            y = jnp.dot(w_ref[s], x, preferred_element_type=jnp.float32)
            if s < N_STAGES - 1:
                # BatchNorm2d (training): single-pass batch stats over pixels.
                # Conv bias omitted here: it cancels exactly in (y - mean).
                gamma = scal_ref[:, s:s + 1]                       # (16, 1)
                beta = scal_ref[:, N_STAGES + s:N_STAGES + s + 1]  # (16, 1)
                m1 = jnp.mean(y, axis=1, keepdims=True)
                m2 = jnp.mean(y * y, axis=1, keepdims=True)
                var = m2 - m1 * m1
                y = (y - m1) * lax.rsqrt(var + EPS) * gamma + beta
            else:
                # last stage has no BN -> conv bias matters
                y = y + scal_ref[:, 2 * N_STAGES + s:2 * N_STAGES + s + 1]
            a, b = y[:C_OUT, :], y[C_OUT:, :]
            if s == 4:
                # divide via EUP reciprocal + one Newton step (~f32-exact)
                r = pl.reciprocal(b, approx=True)
                r = r * (2.0 - b * r)
                x = a * r
            else:
                x = BINOPS[s](a, b)
        o_ref[...] = x
    return kernel


# ------------------------------- JAX glue -------------------------------------
def subsample_nchw(x):
    """Conv2d(k=1, stride=2, pad=1) spatial gather, done as pad + strided slice."""
    N, C, H, W = x.shape
    Ho, Wo = _next_hw(H), _next_hw(W)
    xp = jnp.pad(x, ((0, 0), (0, 0), (1, 1), (1, 1)))
    return xp[:, :, :2 * Ho:2, :2 * Wo:2]


def _full_spec(shape):
    n = len(shape)
    return pl.BlockSpec(shape, lambda i, _n=n: (0,) * _n)


def build_forward(N, Cin, H, W):
    dims = stage_dims(H, W)
    sel_packed, meta = build_sel_pack(N, dims)
    kernel = make_kernel(meta)
    Hl, Wl = dims[-1]
    P_last = N * Hl * Wl

    def fwd(x1, x2, w_all, scal, sel):
        # stage-0 subsample in the wrapper (kills the dominant sel matrix)
        x1s = subsample_nchw(x1.astype(jnp.float32))
        x2s = subsample_nchw(x2.astype(jnp.float32))
        H1, W1 = x1s.shape[2], x1s.shape[3]
        P1 = N * H1 * W1
        # channels -> sublanes, pixels -> lanes
        x1t = jnp.transpose(x1s, (1, 0, 2, 3)).reshape(Cin, P1)
        x2t = jnp.transpose(x2s, (1, 0, 2, 3)).reshape(Cin, P1)
        x0 = jnp.concatenate(
            [x1t, x2t, jnp.zeros((C_OUT - 2 * Cin, P1), jnp.float32)], axis=0)

        out = pl.pallas_call(
            kernel,
            out_shape=jax.ShapeDtypeStruct((C_OUT, P_last), jnp.float32),
            grid=(1,),
            in_specs=[_full_spec(x0.shape), _full_spec(w_all.shape),
                      _full_spec(scal.shape), _full_spec(sel.shape)],
            out_specs=_full_spec((C_OUT, P_last)),
            compiler_params=pltpu.CompilerParams(
                dimension_semantics=("arbitrary",)),
        )(x0, w_all, scal, sel)
        # (8, P_last) -> NCHW
        return jnp.transpose(out.reshape(C_OUT, N, Hl, Wl), (1, 0, 2, 3))

    return jax.jit(fwd), sel_packed, dims


# ------------------------- deterministic parameters ---------------------------
def make_params(key):
    cins = [3, 8, 8, 8, 8, 8, 8]
    params = []
    for s, cin in enumerate(cins):
        key, ka_w, ka_b, kb_w, kb_b = jax.random.split(key, 5)
        bound = 1.0 / (cin ** 0.5)
        wa = jax.random.uniform(ka_w, (cin, C_OUT), jnp.float32, -bound, bound)
        ba = jax.random.uniform(ka_b, (1, C_OUT), jnp.float32, -bound, bound)
        wb = jax.random.uniform(kb_w, (cin, C_OUT), jnp.float32, -bound, bound)
        bb = jax.random.uniform(kb_b, (1, C_OUT), jnp.float32, -bound, bound)
        # Deterministic BN affine params. The "b" BN of the div stage (bn10)
        # gets small gamma / large beta so the divisor stays away from 0.
        ga = jnp.full((1, C_OUT), 1.0, jnp.float32)
        bta = jnp.full((1, C_OUT), 0.1, jnp.float32)
        if s == 4:
            gb = jnp.full((1, C_OUT), 0.3, jnp.float32)
            btb = jnp.full((1, C_OUT), 3.0, jnp.float32)
        else:
            gb = jnp.full((1, C_OUT), 1.0, jnp.float32)
            btb = jnp.full((1, C_OUT), 0.1, jnp.float32)
        params.append((wa, ba, wb, bb, ga, bta, gb, btb))
    return params


def pack_params(params):
    """Merge both convs per stage into one (16, 8) weight (block-diagonal for
    stage 0) and pack all BN/affine scalars + biases into one (16, 21) array."""
    w_all = np.zeros((N_STAGES, 2 * C_OUT, C_OUT), np.float32)
    scal = np.zeros((2 * C_OUT, 3 * N_STAGES), np.float32)
    for s, (wa, ba, wb, bb, ga, bta, gb, btb) in enumerate(params):
        cin = wa.shape[0]
        if s == 0:
            w_all[s, 0:C_OUT, 0:cin] = np.asarray(wa).T
            w_all[s, C_OUT:, cin:2 * cin] = np.asarray(wb).T
        else:
            w_all[s, 0:C_OUT, :] = np.asarray(wa).T
            w_all[s, C_OUT:, :] = np.asarray(wb).T
        scal[0:C_OUT, s] = np.asarray(ga).reshape(-1)
        scal[C_OUT:, s] = np.asarray(gb).reshape(-1)
        scal[0:C_OUT, N_STAGES + s] = np.asarray(bta).reshape(-1)
        scal[C_OUT:, N_STAGES + s] = np.asarray(btb).reshape(-1)
        scal[0:C_OUT, 2 * N_STAGES + s] = np.asarray(ba).reshape(-1)
        scal[C_OUT:, 2 * N_STAGES + s] = np.asarray(bb).reshape(-1)
    return jnp.asarray(w_all), jnp.asarray(scal)


# ------------------------- pure-JAX reference check ---------------------------
def strided_subsample(x):
    # x: (N, H, W, C). Conv2d(k=1, stride=2, pad=1) reads positions 2*o - 1.
    N, H, W, C = x.shape
    Ho, Wo = _next_hw(H), _next_hw(W)
    xp = jnp.pad(x, ((0, 0), (1, 1), (1, 1), (0, 0)))
    return xp[:, :2 * Ho:2, :2 * Wo:2, :]


def ref_forward(x1_nchw, x2_nchw, params):
    def conv_bn(g, w, b, gamma, beta, use_bn):
        y = jnp.einsum('nhwc,cd->nhwd', g, w,
                       preferred_element_type=jnp.float32) + b.reshape(-1)
        if use_bn:
            mean = jnp.mean(y, axis=(0, 1, 2), keepdims=True)
            var = jnp.mean((y - mean) ** 2, axis=(0, 1, 2), keepdims=True)
            y = (y - mean) * jax.lax.rsqrt(var + EPS) * gamma.reshape(-1) \
                + beta.reshape(-1)
        return y

    a1 = jnp.transpose(x1_nchw, (0, 2, 3, 1)).astype(jnp.float32)
    a2 = jnp.transpose(x2_nchw, (0, 2, 3, 1)).astype(jnp.float32)
    g1 = strided_subsample(a1)
    g2 = strided_subsample(a2)
    wa, ba, wb, bb, ga, bta, gb, btb = params[0]
    cur = BINOPS[0](conv_bn(g1, wa, ba, ga, bta, True),
                    conv_bn(g2, wb, bb, gb, btb, True))
    for s in range(1, N_STAGES):
        g = strided_subsample(cur)
        wa, ba, wb, bb, ga, bta, gb, btb = params[s]
        use_bn = s < N_STAGES - 1
        cur = BINOPS[s](conv_bn(g, wa, ba, ga, bta, use_bn),
                        conv_bn(g, wb, bb, gb, btb, use_bn))
    return jnp.transpose(cur, (0, 3, 1, 2))


# ----------------------------------- main --------------------------------------
if __name__ == "__main__":
    key = jax.random.PRNGKey(0)
    k1, k2, kp = jax.random.split(key, 3)
    # small NCHW inputs consistent with the module (3 input channels)
    N, Cin, H, W = 2, 3, 16, 16
    x1 = jax.random.normal(k1, (N, Cin, H, W), jnp.float32)
    x2 = jax.random.normal(k2, (N, Cin, H, W), jnp.float32)

    params = make_params(kp)
    w_all, scal = pack_params(params)
    fwd, sel_packed, dims = build_forward(N, Cin, H, W)

    out = jax.block_until_ready(fwd(x1, x2, w_all, scal, sel_packed))

    ref = jax.block_until_ready(ref_forward(x1, x2, params))
    Hl, Wl = dims[-1]
    assert out.shape == ref.shape == (N, C_OUT, Hl, Wl), (out.shape, ref.shape)
    assert bool(jnp.all(jnp.isfinite(out)))
    assert bool(jnp.allclose(out, ref, rtol=1e-3, atol=1e-3)), \
        float(jnp.max(jnp.abs(out - ref)))

    print("KERNEL_OK")
</pallas_src>

<mosaic_0001>
module attributes {stable_mosaic.version = 11 : i64} {
  func.func @kernel(%arg0: i32, %arg1: memref<8x162xf32, #tpu.memory_space<vmem>>, %arg2: memref<7x16x8xf32, #tpu.memory_space<vmem>>, %arg3: memref<16x21xf32, #tpu.memory_space<vmem>>, %arg4: memref<272x72xf32, #tpu.memory_space<vmem>>, %arg5: memref<8x18xf32, #tpu.memory_space<vmem>>) attributes {dimension_semantics = [#tpu.dimension_semantics<arbitrary>], iteration_bounds = array<i64: 1>, scalar_prefetch = 0 : i64, scratch_operands = 0 : i64, tpu.core_type = #tpu.core_type<tc>, window_params = [{pipeline_mode = #tpu.pipeline_mode<synchronous>, transform_indices = @transform_0, window_bounds = array<i64: 8, 162>}, {pipeline_mode = #tpu.pipeline_mode<synchronous>, transform_indices = @transform_1, window_bounds = array<i64: 7, 16, 8>}, {pipeline_mode = #tpu.pipeline_mode<synchronous>, transform_indices = @transform_2, window_bounds = array<i64: 16, 21>}, {pipeline_mode = #tpu.pipeline_mode<synchronous>, transform_indices = @transform_3, window_bounds = array<i64: 272, 72>}, {pipeline_mode = #tpu.pipeline_mode<synchronous>, transform_indices = @transform_4, window_bounds = array<i64: 8, 18>}]} {
    %c0 = arith.constant 0 : index
    %c0_0 = arith.constant 0 : index
    %0 = vector.load %arg1[%c0, %c0_0] : memref<8x162xf32, #tpu.memory_space<vmem>>, vector<8x162xf32>
    %c0_1 = arith.constant 0 : index
    %c0_2 = arith.constant 0 : index
    %c0_3 = arith.constant 0 : index
    %1 = vector.load %arg2[%c0_1, %c0_2, %c0_3] : memref<7x16x8xf32, #tpu.memory_space<vmem>>, vector<1x16x8xf32>
    %2 = vector.shape_cast %1 : vector<1x16x8xf32> to vector<16x8xf32>
    %cst = arith.constant dense<0.000000e+00> : vector<16x162xf32>
    %3 = tpu.matmul %2, %0, %cst {dimension_numbers = #tpu.dot_dimension_numbers<[1], [0], [0], [1], [0, 0, 1, 1], [], []>} : vector<16x8xf32>, vector<8x162xf32>, vector<16x162xf32> -> vector<16x162xf32>
    %c0_4 = arith.constant 0 : index
    %c0_5 = arith.constant 0 : index
    %4 = vector.load %arg3[%c0_4, %c0_5] : memref<16x21xf32, #tpu.memory_space<vmem>>, vector<16x1xf32>
    %c0_6 = arith.constant 0 : index
    %c7 = arith.constant 7 : index
    %5 = vector.load %arg3[%c0_6, %c7] : memref<16x21xf32, #tpu.memory_space<vmem>>, vector<16x1xf32>
    %cst_7 = arith.constant dense<0.000000e+00> : vector<16xf32>
    %6 = vector.multi_reduction <add>, %3, %cst_7 [1] : vector<16x162xf32> to vector<16xf32>
    %7 = vector.shape_cast %6 : vector<16xf32> to vector<16x1xf32>
    %cst_8 = arith.constant 1.620000e+02 : f32
    %8 = vector.broadcast %cst_8 : f32 to vector<16x1xf32>
    %9 = arith.divf %7, %8 : vector<16x1xf32>
    %10 = arith.mulf %3, %3 : vector<16x162xf32>
    %cst_9 = arith.constant dense<0.000000e+00> : vector<16xf32>
    %11 = vector.multi_reduction <add>, %10, %cst_9 [1] : vector<16x162xf32> to vector<16xf32>
    %12 = vector.shape_cast %11 : vector<16xf32> to vector<16x1xf32>
    %cst_10 = arith.constant 1.620000e+02 : f32
    %13 = vector.broadcast %cst_10 : f32 to vector<16x1xf32>
    %14 = arith.divf %12, %13 : vector<16x1xf32>
    %15 = arith.mulf %9, %9 : vector<16x1xf32>
    %16 = arith.subf %14, %15 : vector<16x1xf32>
    %17 = vector.broadcast %9 : vector<16x1xf32> to vector<16x162xf32>
    %18 = arith.subf %3, %17 : vector<16x162xf32>
    %cst_11 = arith.constant 9.99999974E-6 : f32
    %19 = vector.broadcast %cst_11 : f32 to vector<16x1xf32>
    %20 = arith.addf %16, %19 : vector<16x1xf32>
    %21 = math.rsqrt %20 : vector<16x1xf32>
    %22 = vector.broadcast %21 : vector<16x1xf32> to vector<16x162xf32>
    %23 = arith.mulf %18, %22 : vector<16x162xf32>
    %24 = vector.broadcast %4 : vector<16x1xf32> to vector<16x162xf32>
    %25 = arith.mulf %23, %24 : vector<16x162xf32>
    %26 = vector.broadcast %5 : vector<16x1xf32> to vector<16x162xf32>
    %27 = arith.addf %25, %26 : vector<16x162xf32>
    %28 = vector.extract_strided_slice %27 {offsets = [0, 0], sizes = [8, 162], strides = [1, 1]} : vector<16x162xf32> to vector<8x162xf32>
    %29 = vector.extract_strided_slice %27 {offsets = [8, 0], sizes = [8, 162], strides = [1, 1]} : vector<16x162xf32> to vector<8x162xf32>
    %30 = arith.addf %28, %29 : vector<8x162xf32>
    %c0_12 = arith.constant 0 : index
    %c0_13 = arith.constant 0 : index
    %31 = vector.load %arg4[%c0_12, %c0_13] : memref<272x72xf32, #tpu.memory_space<vmem>>, vector<162x72xf32>
    %cst_14 = arith.constant dense<0.000000e+00> : vector<8x72xf32>
    %32 = tpu.matmul %30, %31, %cst_14 {dimension_numbers = #tpu.dot_dimension_numbers<[1], [0], [0], [1], [0, 0, 1, 1], [], []>} : vector<8x162xf32>, vector<162x72xf32>, vector<8x72xf32> -> vector<8x72xf32>
    %c1 = arith.constant 1 : index
    %c0_15 = arith.constant 0 : index
    %c0_16 = arith.constant 0 : index
    %33 = vector.load %arg2[%c1, %c0_15, %c0_16] : memref<7x16x8xf32, #tpu.memory_space<vmem>>, vector<1x16x8xf32>
    %34 = vector.shape_cast %33 : vector<1x16x8xf32> to vector<16x8xf32>
    %cst_17 = arith.constant dense<0.000000e+00> : vector<16x72xf32>
    %35 = tpu.matmul %34, %32, %cst_17 {dimension_numbers = #tpu.dot_dimension_numbers<[1], [0], [0], [1], [0, 0, 1, 1], [], []>} : vector<16x8xf32>, vector<8x72xf32>, vector<16x72xf32> -> vector<16x72xf32>
    %c0_18 = arith.constant 0 : index
    %c1_19 = arith.constant 1 : index
    %36 = vector.load %arg3[%c0_18, %c1_19] : memref<16x21xf32, #tpu.memory_space<vmem>>, vector<16x1xf32>
    %c0_20 = arith.constant 0 : index
    %c8 = arith.constant 8 : index
    %37 = vector.load %arg3[%c0_20, %c8] : memref<16x21xf32, #tpu.memory_space<vmem>>, vector<16x1xf32>
    %cst_21 = arith.constant dense<0.000000e+00> : vector<16xf32>
    %38 = vector.multi_reduction <add>, %35, %cst_21 [1] : vector<16x72xf32> to vector<16xf32>
    %39 = vector.shape_cast %38 : vector<16xf32> to vector<16x1xf32>
    %cst_22 = arith.constant 7.200000e+01 : f32
    %40 = vector.broadcast %cst_22 : f32 to vector<16x1xf32>
    %41 = arith.divf %39, %40 : vector<16x1xf32>
    %42 = arith.mulf %35, %35 : vector<16x72xf32>
    %cst_23 = arith.constant dense<0.000000e+00> : vector<16xf32>
    %43 = vector.multi_reduction <add>, %42, %cst_23 [1] : vector<16x72xf32> to vector<16xf32>
    %44 = vector.shape_cast %43 : vector<16xf32> to vector<16x1xf32>
    %cst_24 = arith.constant 7.200000e+01 : f32
    %45 = vector.broadcast %cst_24 : f32 to vector<16x1xf32>
    %46 = arith.divf %44, %45 : vector<16x1xf32>
    %47 = arith.mulf %41, %41 : vector<16x1xf32>
    %48 = arith.subf %46, %47 : vector<16x1xf32>
    %49 = vector.broadcast %41 : vector<16x1xf32> to vector<16x72xf32>
    %50 = arith.subf %35, %49 : vector<16x72xf32>
    %cst_25 = arith.constant 9.99999974E-6 : f32
    %51 = vector.broadcast %cst_25 : f32 to vector<16x1xf32>
    %52 = arith.addf %48, %51 : vector<16x1xf32>
    %53 = math.rsqrt %52 : vector<16x1xf32>
    %54 = vector.broadcast %53 : vector<16x1xf32> to vector<16x72xf32>
    %55 = arith.mulf %50, %54 : vector<16x72xf32>
    %56 = vector.broadcast %36 : vector<16x1xf32> to vector<16x72xf32>
    %57 = arith.mulf %55, %56 : vector<16x72xf32>
    %58 = vector.broadcast %37 : vector<16x1xf32> to vector<16x72xf32>
    %59 = arith.addf %57, %58 : vector<16x72xf32>
    %60 = vector.extract_strided_slice %59 {offsets = [0, 0], sizes = [8, 72], strides = [1, 1]} : vector<16x72xf32> to vector<8x72xf32>
    %61 = vector.extract_strided_slice %59 {offsets = [8, 0], sizes = [8, 72], strides = [1, 1]} : vector<16x72xf32> to vector<8x72xf32>
    %62 = arith.mulf %60, %61 : vector<8x72xf32>
    %c168 = arith.constant 168 : index
    %c0_26 = arith.constant 0 : index
    %63 = vector.load %arg4[%c168, %c0_26] : memref<272x72xf32, #tpu.memory_space<vmem>>, vector<72x32xf32>
    %cst_27 = arith.constant dense<0.000000e+00> : vector<8x32xf32>
    %64 = tpu.matmul %62, %63, %cst_27 {dimension_numbers = #tpu.dot_dimension_numbers<[1], [0], [0], [1], [0, 0, 1, 1], [], []>} : vector<8x72xf32>, vector<72x32xf32>, vector<8x32xf32> -> vector<8x32xf32>
    %c2 = arith.constant 2 : index
    %c0_28 = arith.constant 0 : index
    %c0_29 = arith.constant 0 : index
    %65 = vector.load %arg2[%c2, %c0_28, %c0_29] : memref<7x16x8xf32, #tpu.memory_space<vmem>>, vector<1x16x8xf32>
    %66 = vector.shape_cast %65 : vector<1x16x8xf32> to vector<16x8xf32>
    %cst_30 = arith.constant dense<0.000000e+00> : vector<16x32xf32>
    %67 = tpu.matmul %66, %64, %cst_30 {dimension_numbers = #tpu.dot_dimension_numbers<[1], [0], [0], [1], [0, 0, 1, 1], [], []>} : vector<16x8xf32>, vector<8x32xf32>, vector<16x32xf32> -> vector<16x32xf32>
    %c0_31 = arith.constant 0 : index
    %c2_32 = arith.constant 2 : index
    %68 = vector.load %arg3[%c0_31, %c2_32] : memref<16x21xf32, #tpu.memory_space<vmem>>, vector<16x1xf32>
    %c0_33 = arith.constant 0 : index
    %c9 = arith.constant 9 : index
    %69 = vector.load %arg3[%c0_33, %c9] : memref<16x21xf32, #tpu.memory_space<vmem>>, vector<16x1xf32>
    %cst_34 = arith.constant dense<0.000000e+00> : vector<16xf32>
    %70 = vector.multi_reduction <add>, %67, %cst_34 [1] : vector<16x32xf32> to vector<16xf32>
    %71 = vector.shape_cast %70 : vector<16xf32> to vector<16x1xf32>
    %cst_35 = arith.constant 3.200000e+01 : f32
    %72 = vector.broadcast %cst_35 : f32 to vector<16x1xf32>
    %73 = arith.divf %71, %72 : vector<16x1xf32>
    %74 = arith.mulf %67, %67 : vector<16x32xf32>
    %cst_36 = arith.constant dense<0.000000e+00> : vector<16xf32>
    %75 = vector.multi_reduction <add>, %74, %cst_36 [1] : vector<16x32xf32> to vector<16xf32>
    %76 = vector.shape_cast %75 : vector<16xf32> to vector<16x1xf32>
    %cst_37 = arith.constant 3.200000e+01 : f32
    %77 = vector.broadcast %cst_37 : f32 to vector<16x1xf32>
    %78 = arith.divf %76, %77 : vector<16x1xf32>
    %79 = arith.mulf %73, %73 : vector<16x1xf32>
    %80 = arith.subf %78, %79 : vector<16x1xf32>
    %81 = vector.broadcast %73 : vector<16x1xf32> to vector<16x32xf32>
    %82 = arith.subf %67, %81 : vector<16x32xf32>
    %cst_38 = arith.constant 9.99999974E-6 : f32
    %83 = vector.broadcast %cst_38 : f32 to vector<16x1xf32>
    %84 = arith.addf %80, %83 : vector<16x1xf32>
    %85 = math.rsqrt %84 : vector<16x1xf32>
    %86 = vector.broadcast %85 : vector<16x1xf32> to vector<16x32xf32>
    %87 = arith.mulf %82, %86 : vector<16x32xf32>
    %88 = vector.broadcast %68 : vector<16x1xf32> to vector<16x32xf32>
    %89 = arith.mulf %87, %88 : vector<16x32xf32>
    %90 = vector.broadcast %69 : vector<16x1xf32> to vector<16x32xf32>
    %91 = arith.addf %89, %90 : vector<16x32xf32>
    %92 = vector.extract_strided_slice %91 {offsets = [0, 0], sizes = [8, 32], strides = [1, 1]} : vector<16x32xf32> to vector<8x32xf32>
    %93 = vector.extract_strided_slice %91 {offsets = [8, 0], sizes = [8, 32], strides = [1, 1]} : vector<16x32xf32> to vector<8x32xf32>
    %94 = arith.subf %92, %93 : vector<8x32xf32>
    %c240 = arith.constant 240 : index
    %c0_39 = arith.constant 0 : index
    %95 = vector.load %arg4[%c240, %c0_39] : memref<272x72xf32, #tpu.memory_space<vmem>>, vector<32x18xf32>
    %cst_40 = arith.constant dense<0.000000e+00> : vector<8x18xf32>
    %96 = tpu.matmul %94, %95, %cst_40 {dimension_numbers = #tpu.dot_dimension_numbers<[1], [0], [0], [1], [0, 0, 1, 1], [], []>} : vector<8x32xf32>, vector<32x18xf32>, vector<8x18xf32> -> vector<8x18xf32>
    %c3 = arith.constant 3 : index
    %c0_41 = arith.constant 0 : index
    %c0_42 = arith.constant 0 : index
    %97 = vector.load %arg2[%c3, %c0_41, %c0_42] : memref<7x16x8xf32, #tpu.memory_space<vmem>>, vector<1x16x8xf32>
    %98 = vector.shape_cast %97 : vector<1x16x8xf32> to vector<16x8xf32>
    %cst_43 = arith.constant dense<0.000000e+00> : vector<16x18xf32>
    %99 = tpu.matmul %98, %96, %cst_43 {dimension_numbers = #tpu.dot_dimension_numbers<[1], [0], [0], [1], [0, 0, 1, 1], [], []>} : vector<16x8xf32>, vector<8x18xf32>, vector<16x18xf32> -> vector<16x18xf32>
    %c0_44 = arith.constant 0 : index
    %c3_45 = arith.constant 3 : index
    %100 = vector.load %arg3[%c0_44, %c3_45] : memref<16x21xf32, #tpu.memory_space<vmem>>, vector<16x1xf32>
    %c0_46 = arith.constant 0 : index
    %c10 = arith.constant 10 : index
    %101 = vector.load %arg3[%c0_46, %c10] : memref<16x21xf32, #tpu.memory_space<vmem>>, vector<16x1xf32>
    %cst_47 = arith.constant dense<0.000000e+00> : vector<16xf32>
    %102 = vector.multi_reduction <add>, %99, %cst_47 [1] : vector<16x18xf32> to vector<16xf32>
    %103 = vector.shape_cast %102 : vector<16xf32> to vector<16x1xf32>
    %cst_48 = arith.constant 1.800000e+01 : f32
    %104 = vector.broadcast %cst_48 : f32 to vector<16x1xf32>
    %105 = arith.divf %103, %104 : vector<16x1xf32>
    %106 = arith.mulf %99, %99 : vector<16x18xf32>
    %cst_49 = arith.constant dense<0.000000e+00> : vector<16xf32>
    %107 = vector.multi_reduction <add>, %106, %cst_49 [1] : vector<16x18xf32> to vector<16xf32>
    %108 = vector.shape_cast %107 : vector<16xf32> to vector<16x1xf32>
    %cst_50 = arith.constant 1.800000e+01 : f32
    %109 = vector.broadcast %cst_50 : f32 to vector<16x1xf32>
    %110 = arith.divf %108, %109 : vector<16x1xf32>
    %111 = arith.mulf %105, %105 : vector<16x1xf32>
    %112 = arith.subf %110, %111 : vector<16x1xf32>
    %113 = vector.broadcast %105 : vector<16x1xf32> to vector<16x18xf32>
    %114 = arith.subf %99, %113 : vector<16x18xf32>
    %cst_51 = arith.constant 9.99999974E-6 : f32
    %115 = vector.broadcast %cst_51 : f32 to vector<16x1xf32>
    %116 = arith.addf %112, %115 : vector<16x1xf32>
    %117 = math.rsqrt %116 : vector<16x1xf32>
    %118 = vector.broadcast %117 : vector<16x1xf32> to vector<16x18xf32>
    %119 = arith.mulf %114, %118 : vector<16x18xf32>
    %120 = vector.broadcast %100 : vector<16x1xf32> to vector<16x18xf32>
    %121 = arith.mulf %119, %120 : vector<16x18xf32>
    %122 = vector.broadcast %101 : vector<16x1xf32> to vector<16x18xf32>
    %123 = arith.addf %121, %122 : vector<16x18xf32>
    %124 = vector.extract_strided_slice %123 {offsets = [0, 0], sizes = [8, 18], strides = [1, 1]} : vector<16x18xf32> to vector<8x18xf32>
    %125 = vector.extract_strided_slice %123 {offsets = [8, 0], sizes = [8, 18], strides = [1, 1]} : vector<16x18xf32> to vector<8x18xf32>
    %126 = arith.addf %124, %125 : vector<8x18xf32>
    %127 = tpu.iota {dimensions = array<i32: 1>} : vector<8x18xi32>
    %c9_i32 = arith.constant 9 : i32
    %c0_i32 = arith.constant 0 : i32
    %128 = arith.cmpi eq, %c9_i32, %c0_i32 : i32
    %c1_i32 = arith.constant 1 : i32
    %129 = arith.select %128, %c1_i32, %c9_i32 : i32
    %130 = vector.broadcast %129 : i32 to vector<8x18xi32>
    %131 = arith.remsi %127, %130 : vector<8x18xi32>
    %c0_i32_52 = arith.constant 0 : i32
    %132 = vector.broadcast %c0_i32_52 : i32 to vector<8x18xi32>
    %133 = arith.cmpi ne, %131, %132 : vector<8x18xi32>
    %c0_i32_53 = arith.constant 0 : i32
    %134 = vector.broadcast %c0_i32_53 : i32 to vector<8x18xi32>
    %135 = arith.cmpi slt, %131, %134 : vector<8x18xi32>
    %c0_i32_54 = arith.constant 0 : i32
    %136 = arith.cmpi slt, %129, %c0_i32_54 : i32
    %137 = vector.broadcast %136 : i1 to vector<8x18xi1>
    %138 = vector.broadcast %137 : vector<8x18xi1> to vector<8x18xi1>
    %139 = arith.xori %135, %138 : vector<8x18xi1>
    %140 = arith.andi %139, %133 : vector<8x18xi1>
    %141 = vector.broadcast %129 : i32 to vector<8x18xi32>
    %142 = arith.addi %131, %141 : vector<8x18xi32>
    %143 = arith.select %140, %142, %131 : vector<8x18xi1>, vector<8x18xi32>
    %c4_i32 = arith.constant 4 : i32
    %144 = vector.broadcast %c4_i32 : i32 to vector<8x18xi32>
    %145 = arith.cmpi eq, %143, %144 : vector<8x18xi32>
    %cst_55 = arith.constant 0.000000e+00 : f32
    %146 = vector.broadcast %cst_55 : f32 to vector<8x18xf32>
    %147 = arith.select %145, %126, %146 : vector<8x18xi1>, vector<8x18xf32>
    %c4 = arith.constant 4 : index
    %c0_56 = arith.constant 0 : index
    %c0_57 = arith.constant 0 : index
    %148 = vector.load %arg2[%c4, %c0_56, %c0_57] : memref<7x16x8xf32, #tpu.memory_space<vmem>>, vector<1x16x8xf32>
    %149 = vector.shape_cast %148 : vector<1x16x8xf32> to vector<16x8xf32>
    %cst_58 = arith.constant dense<0.000000e+00> : vector<16x18xf32>
    %150 = tpu.matmul %149, %147, %cst_58 {dimension_numbers = #tpu.dot_dimension_numbers<[1], [0], [0], [1], [0, 0, 1, 1], [], []>} : vector<16x8xf32>, vector<8x18xf32>, vector<16x18xf32> -> vector<16x18xf32>
    %c0_59 = arith.constant 0 : index
    %c4_60 = arith.constant 4 : index
    %151 = vector.load %arg3[%c0_59, %c4_60] : memref<16x21xf32, #tpu.memory_space<vmem>>, vector<16x1xf32>
    %c0_61 = arith.constant 0 : index
    %c11 = arith.constant 11 : index
    %152 = vector.load %arg3[%c0_61, %c11] : memref<16x21xf32, #tpu.memory_space<vmem>>, vector<16x1xf32>
    %cst_62 = arith.constant dense<0.000000e+00> : vector<16xf32>
    %153 = vector.multi_reduction <add>, %150, %cst_62 [1] : vector<16x18xf32> to vector<16xf32>
    %154 = vector.shape_cast %153 : vector<16xf32> to vector<16x1xf32>
    %cst_63 = arith.constant 1.800000e+01 : f32
    %155 = vector.broadcast %cst_63 : f32 to vector<16x1xf32>
    %156 = arith.divf %154, %155 : vector<16x1xf32>
    %157 = arith.mulf %150, %150 : vector<16x18xf32>
    %cst_64 = arith.constant dense<0.000000e+00> : vector<16xf32>
    %158 = vector.multi_reduction <add>, %157, %cst_64 [1] : vector<16x18xf32> to vector<16xf32>
    %159 = vector.shape_cast %158 : vector<16xf32> to vector<16x1xf32>
    %cst_65 = arith.constant 1.800000e+01 : f32
    %160 = vector.broadcast %cst_65 : f32 to vector<16x1xf32>
    %161 = arith.divf %159, %160 : vector<16x1xf32>
    %162 = arith.mulf %156, %156 : vector<16x1xf32>
    %163 = arith.subf %161, %162 : vector<16x1xf32>
    %164 = vector.broadcast %156 : vector<16x1xf32> to vector<16x18xf32>
    %165 = arith.subf %150, %164 : vector<16x18xf32>
    %cst_66 = arith.constant 9.99999974E-6 : f32
    %166 = vector.broadcast %cst_66 : f32 to vector<16x1xf32>
    %167 = arith.addf %163, %166 : vector<16x1xf32>
    %168 = math.rsqrt %167 : vector<16x1xf32>
    %169 = vector.broadcast %168 : vector<16x1xf32> to vector<16x18xf32>
    %170 = arith.mulf %165, %169 : vector<16x18xf32>
    %171 = vector.broadcast %151 : vector<16x1xf32> to vector<16x18xf32>
    %172 = arith.mulf %170, %171 : vector<16x18xf32>
    %173 = vector.broadcast %152 : vector<16x1xf32> to vector<16x18xf32>
    %174 = arith.addf %172, %173 : vector<16x18xf32>
    %175 = vector.extract_strided_slice %174 {offsets = [0, 0], sizes = [8, 18], strides = [1, 1]} : vector<16x18xf32> to vector<8x18xf32>
    %176 = vector.extract_strided_slice %174 {offsets = [8, 0], sizes = [8, 18], strides = [1, 1]} : vector<16x18xf32> to vector<8x18xf32>
    %177 = tpu.reciprocal %176 {approx = true} : vector<8x18xf32> -> vector<8x18xf32>
    %178 = arith.mulf %176, %177 : vector<8x18xf32>
    %cst_67 = arith.constant 2.000000e+00 : f32
    %179 = vector.broadcast %cst_67 : f32 to vector<8x18xf32>
    %180 = arith.subf %179, %178 : vector<8x18xf32>
    %181 = arith.mulf %177, %180 : vector<8x18xf32>
    %182 = arith.mulf %175, %181 : vector<8x18xf32>
    %183 = tpu.iota {dimensions = array<i32: 1>} : vector<8x18xi32>
    %c9_i32_68 = arith.constant 9 : i32
    %c0_i32_69 = arith.constant 0 : i32
    %184 = arith.cmpi eq, %c9_i32_68, %c0_i32_69 : i32
    %c1_i32_70 = arith.constant 1 : i32
    %185 = arith.select %184, %c1_i32_70, %c9_i32_68 : i32
    %186 = vector.broadcast %185 : i32 to vector<8x18xi32>
    %187 = arith.remsi %183, %186 : vector<8x18xi32>
    %c0_i32_71 = arith.constant 0 : i32
    %188 = vector.broadcast %c0_i32_71 : i32 to vector<8x18xi32>
    %189 = arith.cmpi ne, %187, %188 : vector<8x18xi32>
    %c0_i32_72 = arith.constant 0 : i32
    %190 = vector.broadcast %c0_i32_72 : i32 to vector<8x18xi32>
    %191 = arith.cmpi slt, %187, %190 : vector<8x18xi32>
    %c0_i32_73 = arith.constant 0 : i32
    %192 = arith.cmpi slt, %185, %c0_i32_73 : i32
    %193 = vector.broadcast %192 : i1 to vector<8x18xi1>
    %194 = vector.broadcast %193 : vector<8x18xi1> to vector<8x18xi1>
    %195 = arith.xori %191, %194 : vector<8x18xi1>
    %196 = arith.andi %195, %189 : vector<8x18xi1>
    %197 = vector.broadcast %185 : i32 to vector<8x18xi32>
    %198 = arith.addi %187, %197 : vector<8x18xi32>
    %199 = arith.select %196, %198, %187 : vector<8x18xi1>, vector<8x18xi32>
    %c4_i32_74 = arith.constant 4 : i32
    %200 = vector.broadcast %c4_i32_74 : i32 to vector<8x18xi32>
    %201 = arith.cmpi eq, %199, %200 : vector<8x18xi32>
    %cst_75 = arith.constant 0.000000e+00 : f32
    %202 = vector.broadcast %cst_75 : f32 to vector<8x18xf32>
    %203 = arith.select %201, %182, %202 : vector<8x18xi1>, vector<8x18xf32>
    %c5 = arith.constant 5 : index
    %c0_76 = arith.constant 0 : index
    %c0_77 = arith.constant 0 : index
    %204 = vector.load %arg2[%c5, %c0_76, %c0_77] : memref<7x16x8xf32, #tpu.memory_space<vmem>>, vector<1x16x8xf32>
    %205 = vector.shape_cast %204 : vector<1x16x8xf32> to vector<16x8xf32>
    %cst_78 = arith.constant dense<0.000000e+00> : vector<16x18xf32>
    %206 = tpu.matmul %205, %203, %cst_78 {dimension_numbers = #tpu.dot_dimension_numbers<[1], [0], [0], [1], [0, 0, 1, 1], [], []>} : vector<16x8xf32>, vector<8x18xf32>, vector<16x18xf32> -> vector<16x18xf32>
    %c0_79 = arith.constant 0 : index
    %c5_80 = arith.constant 5 : index
    %207 = vector.load %arg3[%c0_79, %c5_80] : memref<16x21xf32, #tpu.memory_space<vmem>>, vector<16x1xf32>
    %c0_81 = arith.constant 0 : index
    %c12 = arith.constant 12 : index
    %208 = vector.load %arg3[%c0_81, %c12] : memref<16x21xf32, #tpu.memory_space<vmem>>, vector<16x1xf32>
    %cst_82 = arith.constant dense<0.000000e+00> : vector<16xf32>
    %209 = vector.multi_reduction <add>, %206, %cst_82 [1] : vector<16x18xf32> to vector<16xf32>
    %210 = vector.shape_cast %209 : vector<16xf32> to vector<16x1xf32>
    %cst_83 = arith.constant 1.800000e+01 : f32
    %211 = vector.broadcast %cst_83 : f32 to vector<16x1xf32>
    %212 = arith.divf %210, %211 : vector<16x1xf32>
    %213 = arith.mulf %206, %206 : vector<16x18xf32>
    %cst_84 = arith.constant dense<0.000000e+00> : vector<16xf32>
    %214 = vector.multi_reduction <add>, %213, %cst_84 [1] : vector<16x18xf32> to vector<16xf32>
    %215 = vector.shape_cast %214 : vector<16xf32> to vector<16x1xf32>
    %cst_85 = arith.constant 1.800000e+01 : f32
    %216 = vector.broadcast %cst_85 : f32 to vector<16x1xf32>
    %217 = arith.divf %215, %216 : vector<16x1xf32>
    %218 = arith.mulf %212, %212 : vector<16x1xf32>
    %219 = arith.subf %217, %218 : vector<16x1xf32>
    %220 = vector.broadcast %212 : vector<16x1xf32> to vector<16x18xf32>
    %221 = arith.subf %206, %220 : vector<16x18xf32>
    %cst_86 = arith.constant 9.99999974E-6 : f32
    %222 = vector.broadcast %cst_86 : f32 to vector<16x1xf32>
    %223 = arith.addf %219, %222 : vector<16x1xf32>
    %224 = math.rsqrt %223 : vector<16x1xf32>
    %225 = vector.broadcast %224 : vector<16x1xf32> to vector<16x18xf32>
    %226 = arith.mulf %221, %225 : vector<16x18xf32>
    %227 = vector.broadcast %207 : vector<16x1xf32> to vector<16x18xf32>
    %228 = arith.mulf %226, %227 : vector<16x18xf32>
    %229 = vector.broadcast %208 : vector<16x1xf32> to vector<16x18xf32>
    %230 = arith.addf %228, %229 : vector<16x18xf32>
    %231 = vector.extract_strided_slice %230 {offsets = [0, 0], sizes = [8, 18], strides = [1, 1]} : vector<16x18xf32> to vector<8x18xf32>
    %232 = vector.extract_strided_slice %230 {offsets = [8, 0], sizes = [8, 18], strides = [1, 1]} : vector<16x18xf32> to vector<8x18xf32>
    %233 = arith.mulf %231, %232 : vector<8x18xf32>
    %234 = tpu.iota {dimensions = array<i32: 1>} : vector<8x18xi32>
    %c9_i32_87 = arith.constant 9 : i32
    %c0_i32_88 = arith.constant 0 : i32
    %235 = arith.cmpi eq, %c9_i32_87, %c0_i32_88 : i32
    %c1_i32_89 = arith.constant 1 : i32
    %236 = arith.select %235, %c1_i32_89, %c9_i32_87 : i32
    %237 = vector.broadcast %236 : i32 to vector<8x18xi32>
    %238 = arith.remsi %234, %237 : vector<8x18xi32>
    %c0_i32_90 = arith.constant 0 : i32
    %239 = vector.broadcast %c0_i32_90 : i32 to vector<8x18xi32>
    %240 = arith.cmpi ne, %238, %239 : vector<8x18xi32>
    %c0_i32_91 = arith.constant 0 : i32
    %241 = vector.broadcast %c0_i32_91 : i32 to vector<8x18xi32>
    %242 = arith.cmpi slt, %238, %241 : vector<8x18xi32>
    %c0_i32_92 = arith.constant 0 : i32
    %243 = arith.cmpi slt, %236, %c0_i32_92 : i32
    %244 = vector.broadcast %243 : i1 to vector<8x18xi1>
    %245 = vector.broadcast %244 : vector<8x18xi1> to vector<8x18xi1>
    %246 = arith.xori %242, %245 : vector<8x18xi1>
    %247 = arith.andi %246, %240 : vector<8x18xi1>
    %248 = vector.broadcast %236 : i32 to vector<8x18xi32>
    %249 = arith.addi %238, %248 : vector<8x18xi32>
    %250 = arith.select %247, %249, %238 : vector<8x18xi1>, vector<8x18xi32>
    %c4_i32_93 = arith.constant 4 : i32
    %251 = vector.broadcast %c4_i32_93 : i32 to vector<8x18xi32>
    %252 = arith.cmpi eq, %250, %251 : vector<8x18xi32>
    %cst_94 = arith.constant 0.000000e+00 : f32
    %253 = vector.broadcast %cst_94 : f32 to vector<8x18xf32>
    %254 = arith.select %252, %233, %253 : vector<8x18xi1>, vector<8x18xf32>
    %c6 = arith.constant 6 : index
    %c0_95 = arith.constant 0 : index
    %c0_96 = arith.constant 0 : index
    %255 = vector.load %arg2[%c6, %c0_95, %c0_96] : memref<7x16x8xf32, #tpu.memory_space<vmem>>, vector<1x16x8xf32>
    %256 = vector.shape_cast %255 : vector<1x16x8xf32> to vector<16x8xf32>
    %cst_97 = arith.constant dense<0.000000e+00> : vector<16x18xf32>
    %257 = tpu.matmul %256, %254, %cst_97 {dimension_numbers = #tpu.dot_dimension_numbers<[1], [0], [0], [1], [0, 0, 1, 1], [], []>} : vector<16x8xf32>, vector<8x18xf32>, vector<16x18xf32> -> vector<16x18xf32>
    %c0_98 = arith.constant 0 : index
    %c20 = arith.constant 20 : index
    %258 = vector.load %arg3[%c0_98, %c20] : memref<16x21xf32, #tpu.memory_space<vmem>>, vector<16x1xf32>
    %259 = vector.broadcast %258 : vector<16x1xf32> to vector<16x18xf32>
    %260 = arith.addf %257, %259 : vector<16x18xf32>
    %261 = vector.extract_strided_slice %260 {offsets = [0, 0], sizes = [8, 18], strides = [1, 1]} : vector<16x18xf32> to vector<8x18xf32>
    %262 = vector.extract_strided_slice %260 {offsets = [8, 0], sizes = [8, 18], strides = [1, 1]} : vector<16x18xf32> to vector<8x18xf32>
    %263 = arith.subf %261, %262 : vector<8x18xf32>
    %c0_99 = arith.constant 0 : index
    %c0_100 = arith.constant 0 : index
    %264 = vector.load %arg5[%c0_99, %c0_100] : memref<8x18xf32, #tpu.memory_space<vmem>>, vector<8x18xf32>
    tpu.vector_store %arg5[%c0_99, %c0_100], %263 {strides = array<i32>} : memref<8x18xf32, #tpu.memory_space<vmem>>, vector<8x18xf32>,
    return
  }
  func.func @transform_0(%arg0: i32) -> (i32, i32) {
    %c0_i32 = arith.constant 0 : i32
    %c0_i32_0 = arith.constant 0 : i32
    %c0_i32_1 = arith.constant 0 : i32
    return %c0_i32, %c0_i32_0 : i32, i32
  }
  func.func @transform_1(%arg0: i32) -> (i32, i32, i32) {
    %c0_i32 = arith.constant 0 : i32
    %c0_i32_0 = arith.constant 0 : i32
    %c0_i32_1 = arith.constant 0 : i32
    %c0_i32_2 = arith.constant 0 : i32
    return %c0_i32, %c0_i32_0, %c0_i32_1 : i32, i32, i32
  }
  func.func @transform_2(%arg0: i32) -> (i32, i32) {
    %c0_i32 = arith.constant 0 : i32
    %c0_i32_0 = arith.constant 0 : i32
    %c0_i32_1 = arith.constant 0 : i32
    return %c0_i32, %c0_i32_0 : i32, i32
  }
  func.func @transform_3(%arg0: i32) -> (i32, i32) {
    %c0_i32 = arith.constant 0 : i32
    %c0_i32_0 = arith.constant 0 : i32
    %c0_i32_1 = arith.constant 0 : i32
    return %c0_i32, %c0_i32_0 : i32, i32
  }
  func.func @transform_4(%arg0: i32) -> (i32, i32) {
    %c0_i32 = arith.constant 0 : i32
    %c0_i32_0 = arith.constant 0 : i32
    %c0_i32_1 = arith.constant 0 : i32
    return %c0_i32, %c0_i32_0 : i32, i32
  }
}

</mosaic_0001>

<llo_original>
// kernel: fwd.1
$region0: #{fwd.1}
  #allocation0 [shape = 'u32[]', space=smem, size = 0x4, offset = 0x4, fixed_abs, tag = 'smem constant byte address 0x4 - core index']
  #allocation1 [shape = 'u32[144,128]{1,0:T(1,128)}', space=vmem, size = 0x12000, scoped, tag = 'internal scratch']
  %s0 = inlined_call_operand.vmem [shape: f32[8,162], index: 0, kind: input, shape index: {}]
  %s1 = inlined_call_operand.vmem [shape: f32[7,16,8], index: 1, kind: input, shape index: {}]
  %s2 = inlined_call_operand.vmem [shape: f32[16,21], index: 2, kind: input, shape index: {}]
  %s3 = inlined_call_operand.vmem [shape: f32[272,72], index: 3, kind: input, shape index: {}]
  %s4 = inlined_call_operand.vmem [shape: f32[8,18], index: 4, kind: output, shape index: {}]
  %s5 = sld [smem:[#allocation0]]
  $region26: #{fwd.1} parent=0
    _
  %s7 = ssub.s32 1, %s5
  %s8 = scalar_select 0, %s7, %s5
  // Predicated region
  $region2: #{fwd.1} parent=0 // pred_check
    _
  $region3: #{fwd.1} parent=0 // pred_check_branch
    %10 = sbr.rel (0) target = $region5
  $region4: #{fwd.1} parent=0 // pred_region
    _
  $region5: #{fwd.1} parent=0 // pred_fallthru
    _
  // Predicated region
  $region6: #{fwd.1} parent=0 // pred_check
    _
  $region7: #{fwd.1} parent=0 // pred_check_branch
    %12 = sbr.rel (0) target = $region9
  $region8: #{fwd.1} parent=0 // pred_region
    _
  $region9: #{fwd.1} parent=0 // pred_fallthru
    _
  // Predicated region
  $region10: #{fwd.1} parent=0 // pred_check
    _
  $region11: #{fwd.1} parent=0 // pred_check_branch
    %14 = sbr.rel (0) target = $region13
  $region12: #{fwd.1} parent=0 // pred_region
    _
  $region13: #{fwd.1} parent=0 // pred_fallthru
    _
  // Predicated region
  $region14: #{fwd.1} parent=0 // pred_check
    _
  $region15: #{fwd.1} parent=0 // pred_check_branch
    %16 = sbr.rel (0) target = $region17
  $region16: #{fwd.1} parent=0 // pred_region
    _
  $region17: #{fwd.1} parent=0 // pred_fallthru
    _
  %v17 = vld [vmem:[%s0] sm:$0xff]
  %v18 = vld [vmem:[%s0 + $0x8] sm:$0xff]
  %v19 = vld [vmem:[%s1] sm:$0xff]
  %v20 = vld [vmem:[%s1 + $0x8] sm:$0xff]
  %vm21 = vcmask 64512
  %v23 = vsel %vm21, %v19, 0
  %v26 = vsel %vm21, %v20, 0
  %28 = vmatprep.subr.mxu0 %v18
  %29 = vmatpush1.msra.mxu0 %v17
  %30 = vmatprep.subr.mxu0 0.0
  %31 = vmatpush1.msra.mxu0 0.0
  %32 = vmatprep.subr.mxu0 0.0
  %33 = vmatpush1.msra.mxu0 0.0
  %34 = vmatprep.subr.mxu0 0.0
  %35 = vmatpush1.msra.mxu0 0.0
  %36 = vmatprep.subr.mxu0 0.0
  %37 = vmatpush1.msra.mxu0 0.0
  %38 = vmatprep.subr.mxu0 0.0
  %39 = vmatpush1.msra.mxu0 0.0
  %40 = vmatprep.subr.mxu0 0.0
  %41 = vmatpush1.msra.mxu0 0.0
  %42 = vmatprep.subr.mxu0 0.0
  %43 = vmatpush1.msra.mxu0 0.0
  %44 = vmatprep.subr.mxu0 0.0
  %45 = vmatpush1.msra.mxu0 0.0
  %46 = vmatprep.subr.mxu0 0.0
  %47 = vmatpush1.msra.mxu0 0.0
  %48 = vmatprep.subr.mxu0 0.0
  %49 = vmatpush1.msra.mxu0 0.0
  %50 = vmatprep.subr.mxu0 0.0
  %51 = vmatpush1.msra.mxu0 0.0
  %52 = vmatprep.subr.mxu0 0.0
  %53 = vmatpush1.msra.mxu0 0.0
  %54 = vmatprep.subr.mxu0 0.0
  %55 = vmatpush1.msra.mxu0 0.0
  %56 = vmatprep.subr.mxu0 0.0
  %57 = vmatpush1.msra.mxu0 0.0
  %58 = vmatprep.subr.mxu0 0.0
  %59 = vmatpush1.msra.mxu0 0.0
  %60 = vmatprep.subr.mxu0 0.0
  %61 = vmatpush1.msra.mxu0 0.0
  %62 = vmatprep.subr.mxu0 0.0
  %63 = vmatpush1.msra.mxu0 0.0
  %64 = vmatprep.subr.mxu0 0.0
  %65 = vmatpush1.msra.mxu0 0.0
  %66 = vmatprep.subr.mxu0 0.0
  %67 = vmatpush1.msra.mxu0 0.0
  %68 = vmatprep.subr.mxu0 0.0
  %69 = vmatpush1.msra.mxu0 0.0
  %70 = vmatprep.subr.mxu0 0.0
  %71 = vmatpush1.msra.mxu0 0.0
  %72 = vmatprep.subr.mxu0 0.0
  %73 = vmatpush1.msra.mxu0 0.0
  %74 = vmatprep.subr.mxu0 0.0
  %75 = vmatpush1.msra.mxu0 0.0
  %76 = vmatprep.subr.mxu0 0.0
  %77 = vmatpush1.msra.mxu0 0.0
  %78 = vmatprep.subr.mxu0 0.0
  %79 = vmatpush1.msra.mxu0 0.0
  %80 = vmatprep.subr.mxu0 0.0
  %81 = vmatpush1.msra.mxu0 0.0
  %82 = vmatprep.subr.mxu0 0.0
  %83 = vmatpush1.msra.mxu0 0.0
  %84 = vmatprep.subr.mxu0 0.0
  %85 = vmatpush1.msra.mxu0 0.0
  %86 = vmatprep.subr.mxu0 0.0
  %87 = vmatpush1.msra.mxu0 0.0
  %88 = vmatprep.subr.mxu0 0.0
  %89 = vmatpush1.msra.mxu0 0.0
  %90 = vmatprep.subr.mxu0 0.0
  %91 = vmatpush1.msra.mxu0 0.0
  %92 = vmatprep.mubr.f32.mxu0 0.0
  %93 = vmatmul.mubr.f32.gmra.mrb[0].mxu0 %v23
  %v94 = vpop.f32.mrb[0].mxu0
  %v95 = vadd.f32 0.0, %v94
  %v96 = vpop.f32.mrb[0].mxu0
  %v97 = vadd.f32 0.0, %v96
  %98 = vmatprep.mubr.f32.mxu0 0.0
  %99 = vmatmul.mubr.f32.gmra.mrb[0].mxu0 %v26
  %v100 = vpop.f32.mrb[0].mxu0
  %v101 = vadd.f32 0.0, %v100
  %v102 = vpop.f32.mrb[0].mxu0
  %v103 = vadd.f32 0.0, %v102
  %104 = vdwg.mxu0
  %v105 = vld [vmem:[%s2] sm:$0xff]
  %v106 = vld [vmem:[%s2 + $0x8] sm:$0xff]
  %vm107 = vcmask 277504
  %v108 = vsel %vm107, %v97, 0.0
  %v109 = vadd.f32 %v95, %v108
  %110 = vadd.xlane.f32.xlu0 %v109
  %v111 = vpop.xlane.xlu0 %110
  %v112 = vsel %vm107, %v103, 0.0
  %v113 = vadd.f32 %v101, %v112
  %114 = vadd.xlane.f32.xlu0 %v113
  %v115 = vpop.xlane.xlu0 %114
  %v116 = vrcp.pop 162.0
  %v117 = vmul.f32 %v111, %v116
  %v118 = vmul.f32 %v115, %v116
  %v119 = vmul.f32 %v95, %v95
  %v120 = vmul.f32 %v97, %v97
  %v121 = vmul.f32 %v101, %v101
  %v122 = vmul.f32 %v103, %v103
  %v123 = vsel %vm107, %v120, 0.0
  %v124 = vadd.f32 %v119, %v123
  %125 = vadd.xlane.f32.xlu0 %v124
  %v126 = vpop.xlane.xlu0 %125
  %v127 = vsel %vm107, %v122, 0.0
  %v128 = vadd.f32 %v121, %v127
  %129 = vadd.xlane.f32.xlu0 %v128
  %v130 = vpop.xlane.xlu0 %129
  %v131 = vmul.f32 %v126, %v116
  %v132 = vmul.f32 %v130, %v116
  %v133 = vmul.f32 %v117, %v117
  %v134 = vmul.f32 %v118, %v118
  %v135 = vsub.f32 %v131, %v133
  %v136 = vsub.f32 %v132, %v134
  %v137 = vsub.f32 %v95, %v117
  %v138 = vsub.f32 %v97, %v117
  %v139 = vsub.f32 %v101, %v118
  %v140 = vsub.f32 %v103, %v118
  %v141 = vadd.f32 %v135, 1e-05
  %v142 = vadd.f32 %v136, 1e-05
  %v143 = vrsqrt.pop %v141
  %v144 = vrsqrt.pop %v142
  %v145 = vmul.f32 %v137, %v143
  %v146 = vmul.f32 %v138, %v143
  %v147 = vmul.f32 %v139, %v144
  %v148 = vmul.f32 %v140, %v144
  %150 = vset.pattern.permute.xlu0 0
  %151 = vperm.xlu0 %150, %v105
  %v152 = vpop.permute.xlu0 %151
  %155 = vset.pattern.permute.xlu0 0
  %156 = vperm.xlu0 %155, %v106
  %v157 = vpop.permute.xlu0 %156
  %v159 = vmul.f32 %v145, %v152
  %v160 = vmul.f32 %v146, %v152
  %v161 = vmul.f32 %v147, %v157
  %v162 = vmul.f32 %v148, %v157
  %163 = vset.pattern.permute.xlu0 7
  %164 = vperm.xlu0 %163, %v105
  %v165 = vpop.permute.xlu0 %164
  %167 = vset.pattern.permute.xlu0 7
  %168 = vperm.xlu0 %167, %v106
  %v169 = vpop.permute.xlu0 %168
  %v171 = vadd.f32 %v159, %v165
  %v172 = vadd.f32 %v160, %v165
  %v173 = vadd.f32 %v161, %v169
  %v174 = vadd.f32 %v162, %v169
  %v175 = vadd.f32 %v171, %v173
  %v176 = vadd.f32 %v172, %v174
  %v177 = vld [vmem:[%s3] sm:$0xff]
  %v178 = vld [vmem:[%s3 + $0x8] sm:$0xff]
  %v179 = vld [vmem:[%s3 + $0x10] sm:$0xff]
  %v180 = vld [vmem:[%s3 + $0x18] sm:$0xff]
  %v181 = vld [vmem:[%s3 + $0x20] sm:$0xff]
  %v182 = vld [vmem:[%s3 + $0x28] sm:$0xff]
  %v183 = vld [vmem:[%s3 + $0x30] sm:$0xff]
  %v184 = vld [vmem:[%s3 + $0x38] sm:$0xff]
  %v185 = vld [vmem:[%s3 + $0x40] sm:$0xff]
  %v186 = vld [vmem:[%s3 + $0x48] sm:$0xff]
  %v187 = vld [vmem:[%s3 + $0x50] sm:$0xff]
  %v188 = vld [vmem:[%s3 + $0x58] sm:$0xff]
  %v189 = vld [vmem:[%s3 + $0x60] sm:$0xff]
  %v190 = vld [vmem:[%s3 + $0x68] sm:$0xff]
  %v191 = vld [vmem:[%s3 + $0x70] sm:$0xff]
  %v192 = vld [vmem:[%s3 + $0x78] sm:$0xff]
  %v193 = vld [vmem:[%s3 + $0x80] sm:$0xff]
  %v194 = vld [vmem:[%s3 + $0x88] sm:$0xff]
  %v195 = vld [vmem:[%s3 + $0x90] sm:$0xff]
  %v196 = vld [vmem:[%s3 + $0x98] sm:$0xff]
  %v197 = vld [vmem:[%s3 + $0xa0] sm:$0x3]
  %v199 = vsel %vm107, %v176, 0
  %vm201 = vcmask 1041408
  %v203 = vsel %vm201, %v197, 0
  %205 = vmatprep.subr.mxu0 0.0
  %206 = vmatpush1.msra.mxu0 %v177
  %207 = vmatprep.subr.mxu0 0.0
  %208 = vmatpush1.msra.mxu0 %v178
  %209 = vmatprep.subr.mxu0 0.0
  %210 = vmatpush1.msra.mxu0 %v179
  %211 = vmatprep.subr.mxu0 0.0
  %212 = vmatpush1.msra.mxu0 %v180
  %213 = vmatprep.subr.mxu0 0.0
  %214 = vmatpush1.msra.mxu0 %v181
  %215 = vmatprep.subr.mxu0 0.0
  %216 = vmatpush1.msra.mxu0 %v182
  %217 = vmatprep.subr.mxu0 0.0
  %218 = vmatpush1.msra.mxu0 %v183
  %219 = vmatprep.subr.mxu0 0.0
  %220 = vmatpush1.msra.mxu0 %v184
  %221 = vmatprep.subr.mxu0 0.0
  %222 = vmatpush1.msra.mxu0 %v185
  %223 = vmatprep.subr.mxu0 0.0
  %224 = vmatpush1.msra.mxu0 %v186
  %225 = vmatprep.subr.mxu0 0.0
  %226 = vmatpush1.msra.mxu0 %v187
  %227 = vmatprep.subr.mxu0 0.0
  %228 = vmatpush1.msra.mxu0 %v188
  %229 = vmatprep.subr.mxu0 0.0
  %230 = vmatpush1.msra.mxu0 %v189
  %231 = vmatprep.subr.mxu0 0.0
  %232 = vmatpush1.msra.mxu0 %v190
  %233 = vmatprep.subr.mxu0 0.0
  %234 = vmatpush1.msra.mxu0 %v191
  %235 = vmatprep.subr.mxu0 0.0
  %236 = vmatpush1.msra.mxu0 %v192
  %237 = vmatprep.subr.mxu0 0.0
  %238 = vmatpush1.msra.mxu0 %v193
  %239 = vmatprep.subr.mxu0 0.0
  %240 = vmatpush1.msra.mxu0 %v194
  %241 = vmatprep.subr.mxu0 0.0
  %242 = vmatpush1.msra.mxu0 %v195
  %243 = vmatprep.subr.mxu0 0.0
  %244 = vmatpush1.msra.mxu0 %v196
  %245 = vmatprep.subr.mxu0 0.0
  %246 = vmatpush1.msra.mxu0 %v203
  %247 = vmatprep.subr.mxu0 0.0
  %248 = vmatpush1.msra.mxu0 0.0
  %249 = vmatprep.subr.mxu0 0.0
  %250 = vmatpush1.msra.mxu0 0.0
  %251 = vmatprep.subr.mxu0 0.0
  %252 = vmatpush1.msra.mxu0 0.0
  %253 = vmatprep.subr.mxu0 0.0
  %254 = vmatpush1.msra.mxu0 0.0
  %255 = vmatprep.subr.mxu0 0.0
  %256 = vmatpush1.msra.mxu0 0.0
  %257 = vmatprep.subr.mxu0 0.0
  %258 = vmatpush1.msra.mxu0 0.0
  %259 = vmatprep.subr.mxu0 0.0
  %260 = vmatpush1.msra.mxu0 0.0
  %261 = vmatprep.subr.mxu0 0.0
  %262 = vmatpush1.msra.mxu0 0.0
  %263 = vmatprep.subr.mxu0 0.0
  %264 = vmatpush1.msra.mxu0 0.0
  %265 = vmatprep.subr.mxu0 0.0
  %266 = vmatpush1.msra.mxu0 0.0
  %267 = vmatprep.subr.mxu0 0.0
  %268 = vmatpush1.msra.mxu0 0.0
  %269 = vmatprep.mubr.f32.mxu0 %v199
  %270 = vmatmul.mubr.f32.gmra.mrb[0].mxu0 %v175
  %v271 = vpop.f32.mrb[0].mxu0
  %v272 = vadd.f32 0.0, %v271
  %v273 = vpop.f32.mrb[0].mxu0
  %274 = vdwg.mxu0
  %s275 = scalar_lea.vmem %s1, 16
  %v276 = vld [vmem:[%s275] sm:$0xff]
  %v277 = vld [vmem:[%s275 + $0x8] sm:$0xff]
  %v279 = vsel %vm21, %v276, 0
  %v282 = vsel %vm21, %v277, 0
  %284 = vmatprep.subr.mxu0 0.0
  %285 = vmatpush1.msra.mxu0 %v272
  %286 = vmatprep.subr.mxu0 0.0
  %287 = vmatpush1.msra.mxu0 0.0
  %288 = vmatprep.subr.mxu0 0.0
  %289 = vmatpush1.msra.mxu0 0.0
  %290 = vmatprep.subr.mxu0 0.0
  %291 = vmatpush1.msra.mxu0 0.0
  %292 = vmatprep.subr.mxu0 0.0
  %293 = vmatpush1.msra.mxu0 0.0
  %294 = vmatprep.subr.mxu0 0.0
  %295 = vmatpush1.msra.mxu0 0.0
  %296 = vmatprep.subr.mxu0 0.0
  %297 = vmatpush1.msra.mxu0 0.0
  %298 = vmatprep.subr.mxu0 0.0
  %299 = vmatpush1.msra.mxu0 0.0
  %300 = vmatprep.subr.mxu0 0.0
  %301 = vmatpush1.msra.mxu0 0.0
  %302 = vmatprep.subr.mxu0 0.0
  %303 = vmatpush1.msra.mxu0 0.0
  %304 = vmatprep.subr.mxu0 0.0
  %305 = vmatpush1.msra.mxu0 0.0
  %306 = vmatprep.subr.mxu0 0.0
  %307 = vmatpush1.msra.mxu0 0.0
  %308 = vmatprep.subr.mxu0 0.0
  %309 = vmatpush1.msra.mxu0 0.0
  %310 = vmatprep.subr.mxu0 0.0
  %311 = vmatpush1.msra.mxu0 0.0
  %312 = vmatprep.subr.mxu0 0.0
  %313 = vmatpush1.msra.mxu0 0.0
  %314 = vmatprep.subr.mxu0 0.0
  %315 = vmatpush1.msra.mxu0 0.0
  %316 = vmatprep.subr.mxu0 0.0
  %317 = vmatpush1.msra.mxu0 0.0
  %318 = vmatprep.subr.mxu0 0.0
  %319 = vmatpush1.msra.mxu0 0.0
  %320 = vmatprep.subr.mxu0 0.0
  %321 = vmatpush1.msra.mxu0 0.0
  %322 = vmatprep.subr.mxu0 0.0
  %323 = vmatpush1.msra.mxu0 0.0
  %324 = vmatprep.subr.mxu0 0.0
  %325 = vmatpush1.msra.mxu0 0.0
  %326 = vmatprep.subr.mxu0 0.0
  %327 = vmatpush1.msra.mxu0 0.0
  %328 = vmatprep.subr.mxu0 0.0
  %329 = vmatpush1.msra.mxu0 0.0
  %330 = vmatprep.subr.mxu0 0.0
  %331 = vmatpush1.msra.mxu0 0.0
  %332 = vmatprep.subr.mxu0 0.0
  %333 = vmatpush1.msra.mxu0 0.0
  %334 = vmatprep.subr.mxu0 0.0
  %335 = vmatpush1.msra.mxu0 0.0
  %336 = vmatprep.subr.mxu0 0.0
  %337 = vmatpush1.msra.mxu0 0.0
  %338 = vmatprep.subr.mxu0 0.0
  %339 = vmatpush1.msra.mxu0 0.0
  %340 = vmatprep.subr.mxu0 0.0
  %341 = vmatpush1.msra.mxu0 0.0
  %342 = vmatprep.subr.mxu0 0.0
  %343 = vmatpush1.msra.mxu0 0.0
  %344 = vmatprep.subr.mxu0 0.0
  %345 = vmatpush1.msra.mxu0 0.0
  %346 = vmatprep.subr.mxu0 0.0
  %347 = vmatpush1.msra.mxu0 0.0
  %348 = vmatprep.mubr.f32.mxu0 0.0
  %349 = vmatmul.mubr.f32.gmra.mrb[0].mxu0 %v279
  %v350 = vpop.f32.mrb[0].mxu0
  %v351 = vadd.f32 0.0, %v350
  %v352 = vpop.f32.mrb[0].mxu0
  %353 = vmatprep.mubr.f32.mxu0 0.0
  %354 = vmatmul.mubr.f32.gmra.mrb[0].mxu0 %v282
  %v355 = vpop.f32.mrb[0].mxu0
  %v356 = vadd.f32 0.0, %v355
  %v357 = vpop.f32.mrb[0].mxu0
  %358 = vdwg.mxu0
  %vm359 = vcmask 588800
  %v360 = vsel %vm359, %v351, 0.0
  %361 = vadd.xlane.f32.xlu0 %v360
  %v362 = vpop.xlane.xlu0 %361
  %v363 = vsel %vm359, %v356, 0.0
  %364 = vadd.xlane.f32.xlu0 %v363
  %v365 = vpop.xlane.xlu0 %364
  %v366 = vrcp.pop 72.0
  %v367 = vmul.f32 %v362, %v366
  %v368 = vmul.f32 %v365, %v366
  %v369 = vmul.f32 %v351, %v351
  %v370 = vmul.f32 %v356, %v356
  %v371 = vsel %vm359, %v369, 0.0
  %372 = vadd.xlane.f32.xlu0 %v371
  %v373 = vpop.xlane.xlu0 %372
  %v374 = vsel %vm359, %v370, 0.0
  %375 = vadd.xlane.f32.xlu0 %v374
  %v376 = vpop.xlane.xlu0 %375
  %v377 = vmul.f32 %v373, %v366
  %v378 = vmul.f32 %v376, %v366
  %v379 = vmul.f32 %v367, %v367
  %v380 = vmul.f32 %v368, %v368
  %v381 = vsub.f32 %v377, %v379
  %v382 = vsub.f32 %v378, %v380
  %v383 = vsub.f32 %v351, %v367
  %v384 = vsub.f32 %v356, %v368
  %v385 = vadd.f32 %v381, 1e-05
  %v386 = vadd.f32 %v382, 1e-05
  %v387 = vrsqrt.pop %v385
  %v388 = vrsqrt.pop %v386
  %v389 = vmul.f32 %v383, %v387
  %v390 = vmul.f32 %v384, %v388
  %391 = vset.pattern.permute.xlu0 1
  %392 = vperm.xlu0 %391, %v105
  %v393 = vpop.permute.xlu0 %392
  %395 = vset.pattern.permute.xlu0 1
  %396 = vperm.xlu0 %395, %v106
  %v397 = vpop.permute.xlu0 %396
  %v399 = vmul.f32 %v389, %v393
  %v400 = vmul.f32 %v390, %v397
  %401 = vset.pattern.permute.xlu0 8
  %402 = vperm.xlu0 %401, %v105
  %v403 = vpop.permute.xlu0 %402
  %405 = vset.pattern.permute.xlu0 8
  %406 = vperm.xlu0 %405, %v106
  %v407 = vpop.permute.xlu0 %406
  %v409 = vadd.f32 %v399, %v403
  %v410 = vadd.f32 %v400, %v407
  %v411 = vmul.f32 %v409, %v410
  %v412 = vld [vmem:[%s3 + $0xa8] sm:$0xff]
  %v413 = vld [vmem:[%s3 + $0xb0] sm:$0xff]
  %v414 = vld [vmem:[%s3 + $0xb8] sm:$0xff]
  %v415 = vld [vmem:[%s3 + $0xc0] sm:$0xff]
  %v416 = vld [vmem:[%s3 + $0xc8] sm:$0xff]
  %v417 = vld [vmem:[%s3 + $0xd0] sm:$0xff]
  %v418 = vld [vmem:[%s3 + $0xd8] sm:$0xff]
  %v419 = vld [vmem:[%s3 + $0xe0] sm:$0xff]
  %v420 = vld [vmem:[%s3 + $0xe8] sm:$0xff]
  %v422 = vsel %vm359, %v411, 0
  %424 = vmatprep.subr.mxu0 0.0
  %425 = vmatpush1.msra.mxu0 %v412
  %426 = vmatprep.subr.mxu0 0.0
  %427 = vmatpush1.msra.mxu0 %v413
  %428 = vmatprep.subr.mxu0 0.0
  %429 = vmatpush1.msra.mxu0 %v414
  %430 = vmatprep.subr.mxu0 0.0
  %431 = vmatpush1.msra.mxu0 %v415
  %432 = vmatprep.subr.mxu0 0.0
  %433 = vmatpush1.msra.mxu0 %v416
  %434 = vmatprep.subr.mxu0 0.0
  %435 = vmatpush1.msra.mxu0 %v417
  %436 = vmatprep.subr.mxu0 0.0
  %437 = vmatpush1.msra.mxu0 %v418
  %438 = vmatprep.subr.mxu0 0.0
  %439 = vmatpush1.msra.mxu0 %v419
  %440 = vmatprep.subr.mxu0 0.0
  %441 = vmatpush1.msra.mxu0 %v420
  %442 = vmatprep.subr.mxu0 0.0
  %443 = vmatpush1.msra.mxu0 0.0
  %444 = vmatprep.subr.mxu0 0.0
  %445 = vmatpush1.msra.mxu0 0.0
  %446 = vmatprep.subr.mxu0 0.0
  %447 = vmatpush1.msra.mxu0 0.0
  %448 = vmatprep.subr.mxu0 0.0
  %449 = vmatpush1.msra.mxu0 0.0
  %450 = vmatprep.subr.mxu0 0.0
  %451 = vmatpush1.msra.mxu0 0.0
  %452 = vmatprep.subr.mxu0 0.0
  %453 = vmatpush1.msra.mxu0 0.0
  %454 = vmatprep.subr.mxu0 0.0
  %455 = vmatpush1.msra.mxu0 0.0
  %456 = vmatprep.subr.mxu0 0.0
  %457 = vmatpush1.msra.mxu0 0.0
  %458 = vmatprep.subr.mxu0 0.0
  %459 = vmatpush1.msra.mxu0 0.0
  %460 = vmatprep.subr.mxu0 0.0
  %461 = vmatpush1.msra.mxu0 0.0
  %462 = vmatprep.subr.mxu0 0.0
  %463 = vmatpush1.msra.mxu0 0.0
  %464 = vmatprep.subr.mxu0 0.0
  %465 = vmatpush1.msra.mxu0 0.0
  %466 = vmatprep.subr.mxu0 0.0
  %467 = vmatpush1.msra.mxu0 0.0
  %468 = vmatprep.subr.mxu0 0.0
  %469 = vmatpush1.msra.mxu0 0.0
  %470 = vmatprep.subr.mxu0 0.0
  %471 = vmatpush1.msra.mxu0 0.0
  %472 = vmatprep.subr.mxu0 0.0
  %473 = vmatpush1.msra.mxu0 0.0
  %474 = vmatprep.subr.mxu0 0.0
  %475 = vmatpush1.msra.mxu0 0.0
  %476 = vmatprep.subr.mxu0 0.0
  %477 = vmatpush1.msra.mxu0 0.0
  %478 = vmatprep.subr.mxu0 0.0
  %479 = vmatpush1.msra.mxu0 0.0
  %480 = vmatprep.subr.mxu0 0.0
  %481 = vmatpush1.msra.mxu0 0.0
  %482 = vmatprep.subr.mxu0 0.0
  %483 = vmatpush1.msra.mxu0 0.0
  %484 = vmatprep.subr.mxu0 0.0
  %485 = vmatpush1.msra.mxu0 0.0
  %486 = vmatprep.subr.mxu0 0.0
  %487 = vmatpush1.msra.mxu0 0.0
  %488 = vmatprep.mubr.f32.mxu0 0.0
  %489 = vmatmul.mubr.f32.gmra.mrb[0].mxu0 %v422
  %v490 = vpop.f32.mrb[0].mxu0
  %v491 = vadd.f32 0.0, %v490
  %v492 = vpop.f32.mrb[0].mxu0
  %493 = vdwg.mxu0
  %s494 = scalar_lea.vmem %s1, 32
  %v495 = vld [vmem:[%s494] sm:$0xff]
  %v496 = vld [vmem:[%s494 + $0x8] sm:$0xff]
  %v498 = vsel %vm21, %v495, 0
  %v501 = vsel %vm21, %v496, 0
  %503 = vmatprep.subr.mxu0 0.0
  %504 = vmatpush1.msra.mxu0 %v491
  %505 = vmatprep.subr.mxu0 0.0
  %506 = vmatpush1.msra.mxu0 0.0
  %507 = vmatprep.subr.mxu0 0.0
  %508 = vmatpush1.msra.mxu0 0.0
  %509 = vmatprep.subr.mxu0 0.0
  %510 = vmatpush1.msra.mxu0 0.0
  %511 = vmatprep.subr.mxu0 0.0
  %512 = vmatpush1.msra.mxu0 0.0
  %513 = vmatprep.subr.mxu0 0.0
  %514 = vmatpush1.msra.mxu0 0.0
  %515 = vmatprep.subr.mxu0 0.0
  %516 = vmatpush1.msra.mxu0 0.0
  %517 = vmatprep.subr.mxu0 0.0
  %518 = vmatpush1.msra.mxu0 0.0
  %519 = vmatprep.subr.mxu0 0.0
  %520 = vmatpush1.msra.mxu0 0.0
  %521 = vmatprep.subr.mxu0 0.0
  %522 = vmatpush1.msra.mxu0 0.0
  %523 = vmatprep.subr.mxu0 0.0
  %524 = vmatpush1.msra.mxu0 0.0
  %525 = vmatprep.subr.mxu0 0.0
  %526 = vmatpush1.msra.mxu0 0.0
  %527 = vmatprep.subr.mxu0 0.0
  %528 = vmatpush1.msra.mxu0 0.0
  %529 = vmatprep.subr.mxu0 0.0
  %530 = vmatpush1.msra.mxu0 0.0
  %531 = vmatprep.subr.mxu0 0.0
  %532 = vmatpush1.msra.mxu0 0.0
  %533 = vmatprep.subr.mxu0 0.0
  %534 = vmatpush1.msra.mxu0 0.0
  %535 = vmatprep.subr.mxu0 0.0
  %536 = vmatpush1.msra.mxu0 0.0
  %537 = vmatprep.subr.mxu0 0.0
  %538 = vmatpush1.msra.mxu0 0.0
  %539 = vmatprep.subr.mxu0 0.0
  %540 = vmatpush1.msra.mxu0 0.0
  %541 = vmatprep.subr.mxu0 0.0
  %542 = vmatpush1.msra.mxu0 0.0
  %543 = vmatprep.subr.mxu0 0.0
  %544 = vmatpush1.msra.mxu0 0.0
  %545 = vmatprep.subr.mxu0 0.0
  %546 = vmatpush1.msra.mxu0 0.0
  %547 = vmatprep.subr.mxu0 0.0
  %548 = vmatpush1.msra.mxu0 0.0
  %549 = vmatprep.subr.mxu0 0.0
  %550 = vmatpush1.msra.mxu0 0.0
  %551 = vmatprep.subr.mxu0 0.0
  %552 = vmatpush1.msra.mxu0 0.0
  %553 = vmatprep.subr.mxu0 0.0
  %554 = vmatpush1.msra.mxu0 0.0
  %555 = vmatprep.subr.mxu0 0.0
  %556 = vmatpush1.msra.mxu0 0.0
  %557 = vmatprep.subr.mxu0 0.0
  %558 = vmatpush1.msra.mxu0 0.0
  %559 = vmatprep.subr.mxu0 0.0
  %560 = vmatpush1.msra.mxu0 0.0
  %561 = vmatprep.subr.mxu0 0.0
  %562 = vmatpush1.msra.mxu0 0.0
  %563 = vmatprep.subr.mxu0 0.0
  %564 = vmatpush1.msra.mxu0 0.0
  %565 = vmatprep.subr.mxu0 0.0
  %566 = vmatpush1.msra.mxu0 0.0
  %567 = vmatprep.mubr.f32.mxu0 0.0
  %568 = vmatmul.mubr.f32.gmra.mrb[0].mxu0 %v498
  %v569 = vpop.f32.mrb[0].mxu0
  %v570 = vadd.f32 0.0, %v569
  %v571 = vpop.f32.mrb[0].mxu0
  %572 = vmatprep.mubr.f32.mxu0 0.0
  %573 = vmatmul.mubr.f32.gmra.mrb[0].mxu0 %v501
  %v574 = vpop.f32.mrb[0].mxu0
  %v575 = vadd.f32 0.0, %v574
  %v576 = vpop.f32.mrb[0].mxu0
  %577 = vdwg.mxu0
  %vm578 = vcmask 261120
  %v579 = vsel %vm578, %v570, 0.0
  %580 = vadd.xlane.f32.xlu0 %v579
  %v581 = vpop.xlane.xlu0 %580
  %v582 = vsel %vm578, %v575, 0.0
  %583 = vadd.xlane.f32.xlu0 %v582
  %v584 = vpop.xlane.xlu0 %583
  %v585 = vrcp.pop 32.0
  %v586 = vmul.f32 %v581, %v585
  %v587 = vmul.f32 %v584, %v585
  %v588 = vmul.f32 %v570, %v570
  %v589 = vmul.f32 %v575, %v575
  %v590 = vsel %vm578, %v588, 0.0
  %591 = vadd.xlane.f32.xlu0 %v590
  %v592 = vpop.xlane.xlu0 %591
  %v593 = vsel %vm578, %v589, 0.0
  %594 = vadd.xlane.f32.xlu0 %v593
  %v595 = vpop.xlane.xlu0 %594
  %v596 = vmul.f32 %v592, %v585
  %v597 = vmul.f32 %v595, %v585
  %v598 = vmul.f32 %v586, %v586
  %v599 = vmul.f32 %v587, %v587
  %v600 = vsub.f32 %v596, %v598
  %v601 = vsub.f32 %v597, %v599
  %v602 = vsub.f32 %v570, %v586
  %v603 = vsub.f32 %v575, %v587
  %v604 = vadd.f32 %v600, 1e-05
  %v605 = vadd.f32 %v601, 1e-05
  %v606 = vrsqrt.pop %v604
  %v607 = vrsqrt.pop %v605
  %v608 = vmul.f32 %v602, %v606
  %v609 = vmul.f32 %v603, %v607
  %610 = vset.pattern.permute.xlu0 2
  %611 = vperm.xlu0 %610, %v105
  %v612 = vpop.permute.xlu0 %611
  %614 = vset.pattern.permute.xlu0 2
  %615 = vperm.xlu0 %614, %v106
  %v616 = vpop.permute.xlu0 %615
  %v618 = vmul.f32 %v608, %v612
  %v619 = vmul.f32 %v609, %v616
  %620 = vset.pattern.permute.xlu0 9
  %621 = vperm.xlu0 %620, %v105
  %v622 = vpop.permute.xlu0 %621
  %624 = vset.pattern.permute.xlu0 9
  %625 = vperm.xlu0 %624, %v106
  %v626 = vpop.permute.xlu0 %625
  %v628 = vadd.f32 %v618, %v622
  %v629 = vadd.f32 %v619, %v626
  %v630 = vsub.f32 %v628, %v629
  %v631 = vld [vmem:[%s3 + $0xf0] sm:$0xff]
  %v632 = vld [vmem:[%s3 + $0xf8] sm:$0xff]
  %v633 = vld [vmem:[%s3 + $0x100] sm:$0xff]
  %v634 = vld [vmem:[%s3 + $0x108] sm:$0xff]
  %v636 = vsel %vm578, %v630, 0
  %638 = vmatprep.subr.mxu0 0.0
  %639 = vmatpush1.msra.mxu0 %v631
  %640 = vmatprep.subr.mxu0 0.0
  %641 = vmatpush1.msra.mxu0 %v632
  %642 = vmatprep.subr.mxu0 0.0
  %643 = vmatpush1.msra.mxu0 %v633
  %644 = vmatprep.subr.mxu0 0.0
  %645 = vmatpush1.msra.mxu0 %v634
  %646 = vmatprep.subr.mxu0 0.0
  %647 = vmatpush1.msra.mxu0 0.0
  %648 = vmatprep.subr.mxu0 0.0
  %649 = vmatpush1.msra.mxu0 0.0
  %650 = vmatprep.subr.mxu0 0.0
  %651 = vmatpush1.msra.mxu0 0.0
  %652 = vmatprep.subr.mxu0 0.0
  %653 = vmatpush1.msra.mxu0 0.0
  %654 = vmatprep.subr.mxu0 0.0
  %655 = vmatpush1.msra.mxu0 0.0
  %656 = vmatprep.subr.mxu0 0.0
  %657 = vmatpush1.msra.mxu0 0.0
  %658 = vmatprep.subr.mxu0 0.0
  %659 = vmatpush1.msra.mxu0 0.0
  %660 = vmatprep.subr.mxu0 0.0
  %661 = vmatpush1.msra.mxu0 0.0
  %662 = vmatprep.subr.mxu0 0.0
  %663 = vmatpush1.msra.mxu0 0.0
  %664 = vmatprep.subr.mxu0 0.0
  %665 = vmatpush1.msra.mxu0 0.0
  %666 = vmatprep.subr.mxu0 0.0
  %667 = vmatpush1.msra.mxu0 0.0
  %668 = vmatprep.subr.mxu0 0.0
  %669 = vmatpush1.msra.mxu0 0.0
  %670 = vmatprep.subr.mxu0 0.0
  %671 = vmatpush1.msra.mxu0 0.0
  %672 = vmatprep.subr.mxu0 0.0
  %673 = vmatpush1.msra.mxu0 0.0
  %674 = vmatprep.subr.mxu0 0.0
  %675 = vmatpush1.msra.mxu0 0.0
  %676 = vmatprep.subr.mxu0 0.0
  %677 = vmatpush1.msra.mxu0 0.0
  %678 = vmatprep.subr.mxu0 0.0
  %679 = vmatpush1.msra.mxu0 0.0
  %680 = vmatprep.subr.mxu0 0.0
  %681 = vmatpush1.msra.mxu0 0.0
  %682 = vmatprep.subr.mxu0 0.0
  %683 = vmatpush1.msra.mxu0 0.0
  %684 = vmatprep.subr.mxu0 0.0
  %685 = vmatpush1.msra.mxu0 0.0
  %686 = vmatprep.subr.mxu0 0.0
  %687 = vmatpush1.msra.mxu0 0.0
  %688 = vmatprep.subr.mxu0 0.0
  %689 = vmatpush1.msra.mxu0 0.0
  %690 = vmatprep.subr.mxu0 0.0
  %691 = vmatpush1.msra.mxu0 0.0
  %692 = vmatprep.subr.mxu0 0.0
  %693 = vmatpush1.msra.mxu0 0.0
  %694 = vmatprep.subr.mxu0 0.0
  %695 = vmatpush1.msra.mxu0 0.0
  %696 = vmatprep.subr.mxu0 0.0
  %697 = vmatpush1.msra.mxu0 0.0
  %698 = vmatprep.subr.mxu0 0.0
  %699 = vmatpush1.msra.mxu0 0.0
  %700 = vmatprep.subr.mxu0 0.0
  %701 = vmatpush1.msra.mxu0 0.0
  %702 = vmatprep.mubr.f32.mxu0 0.0
  %703 = vmatmul.mubr.f32.gmra.mrb[0].mxu0 %v636
  %v704 = vpop.f32.mrb[0].mxu0
  %v705 = vadd.f32 0.0, %v704
  %v706 = vpop.f32.mrb[0].mxu0
  %707 = vdwg.mxu0
  %s708 = scalar_lea.vmem %s1, 48
  %v709 = vld [vmem:[%s708] sm:$0xff]
  %v710 = vld [vmem:[%s708 + $0x8] sm:$0xff]
  %v712 = vsel %vm21, %v709, 0
  %v715 = vsel %vm21, %v710, 0
  %717 = vmatprep.subr.mxu0 0.0
  %718 = vmatpush1.msra.mxu0 %v705
  %719 = vmatprep.subr.mxu0 0.0
  %720 = vmatpush1.msra.mxu0 0.0
  %721 = vmatprep.subr.mxu0 0.0
  %722 = vmatpush1.msra.mxu0 0.0
  %723 = vmatprep.subr.mxu0 0.0
  %724 = vmatpush1.msra.mxu0 0.0
  %725 = vmatprep.subr.mxu0 0.0
  %726 = vmatpush1.msra.mxu0 0.0
  %727 = vmatprep.subr.mxu0 0.0
  %728 = vmatpush1.msra.mxu0 0.0
  %729 = vmatprep.subr.mxu0 0.0
  %730 = vmatpush1.msra.mxu0 0.0
  %731 = vmatprep.subr.mxu0 0.0
  %732 = vmatpush1.msra.mxu0 0.0
  %733 = vmatprep.subr.mxu0 0.0
  %734 = vmatpush1.msra.mxu0 0.0
  %735 = vmatprep.subr.mxu0 0.0
  %736 = vmatpush1.msra.mxu0 0.0
  %737 = vmatprep.subr.mxu0 0.0
  %738 = vmatpush1.msra.mxu0 0.0
  %739 = vmatprep.subr.mxu0 0.0
  %740 = vmatpush1.msra.mxu0 0.0
  %741 = vmatprep.subr.mxu0 0.0
  %742 = vmatpush1.msra.mxu0 0.0
  %743 = vmatprep.subr.mxu0 0.0
  %744 = vmatpush1.msra.mxu0 0.0
  %745 = vmatprep.subr.mxu0 0.0
  %746 = vmatpush1.msra.mxu0 0.0
  %747 = vmatprep.subr.mxu0 0.0
  %748 = vmatpush1.msra.mxu0 0.0
  %749 = vmatprep.subr.mxu0 0.0
  %750 = vmatpush1.msra.mxu0 0.0
  %751 = vmatprep.subr.mxu0 0.0
  %752 = vmatpush1.msra.mxu0 0.0
  %753 = vmatprep.subr.mxu0 0.0
  %754 = vmatpush1.msra.mxu0 0.0
  %755 = vmatprep.subr.mxu0 0.0
  %756 = vmatpush1.msra.mxu0 0.0
  %757 = vmatprep.subr.mxu0 0.0
  %758 = vmatpush1.msra.mxu0 0.0
  %759 = vmatprep.subr.mxu0 0.0
  %760 = vmatpush1.msra.mxu0 0.0
  %761 = vmatprep.subr.mxu0 0.0
  %762 = vmatpush1.msra.mxu0 0.0
  %763 = vmatprep.subr.mxu0 0.0
  %764 = vmatpush1.msra.mxu0 0.0
  %765 = vmatprep.subr.mxu0 0.0
  %766 = vmatpush1.msra.mxu0 0.0
  %767 = vmatprep.subr.mxu0 0.0
  %768 = vmatpush1.msra.mxu0 0.0
  %769 = vmatprep.subr.mxu0 0.0
  %770 = vmatpush1.msra.mxu0 0.0
  %771 = vmatprep.subr.mxu0 0.0
  %772 = vmatpush1.msra.mxu0 0.0
  %773 = vmatprep.subr.mxu0 0.0
  %774 = vmatpush1.msra.mxu0 0.0
  %775 = vmatprep.subr.mxu0 0.0
  %776 = vmatpush1.msra.mxu0 0.0
  %777 = vmatprep.subr.mxu0 0.0
  %778 = vmatpush1.msra.mxu0 0.0
  %779 = vmatprep.subr.mxu0 0.0
  %780 = vmatpush1.msra.mxu0 0.0
  %781 = vmatprep.mubr.f32.mxu0 0.0
  %782 = vmatmul.mubr.f32.gmra.mrb[0].mxu0 %v712
  %v783 = vpop.f32.mrb[0].mxu0
  %v784 = vadd.f32 0.0, %v783
  %v785 = vpop.f32.mrb[0].mxu0
  %786 = vmatprep.mubr.f32.mxu0 0.0
  %787 = vmatmul.mubr.f32.gmra.mrb[0].mxu0 %v715
  %v788 = vpop.f32.mrb[0].mxu0
  %v789 = vadd.f32 0.0, %v788
  %v790 = vpop.f32.mrb[0].mxu0
  %791 = vdwg.mxu0
  %vm792 = vcmask 146432
  %v793 = vsel %vm792, %v784, 0.0
  %794 = vadd.xlane.f32.xlu0 %v793
  %v795 = vpop.xlane.xlu0 %794
  %v796 = vsel %vm792, %v789, 0.0
  %797 = vadd.xlane.f32.xlu0 %v796
  %v798 = vpop.xlane.xlu0 %797
  %v799 = vrcp.pop 18.0
  %v800 = vmul.f32 %v795, %v799
  %v801 = vmul.f32 %v798, %v799
  %v802 = vmul.f32 %v784, %v784
  %v803 = vmul.f32 %v789, %v789
  %v804 = vsel %vm792, %v802, 0.0
  %805 = vadd.xlane.f32.xlu0 %v804
  %v806 = vpop.xlane.xlu0 %805
  %v807 = vsel %vm792, %v803, 0.0
  %808 = vadd.xlane.f32.xlu0 %v807
  %v809 = vpop.xlane.xlu0 %808
  %v810 = vmul.f32 %v806, %v799
  %v811 = vmul.f32 %v809, %v799
  %v812 = vmul.f32 %v800, %v800
  %v813 = vmul.f32 %v801, %v801
  %v814 = vsub.f32 %v810, %v812
  %v815 = vsub.f32 %v811, %v813
  %v816 = vsub.f32 %v784, %v800
  %v817 = vsub.f32 %v789, %v801
  %v818 = vadd.f32 %v814, 1e-05
  %v819 = vadd.f32 %v815, 1e-05
  %v820 = vrsqrt.pop %v818
  %v821 = vrsqrt.pop %v819
  %v822 = vmul.f32 %v816, %v820
  %v823 = vmul.f32 %v817, %v821
  %824 = vset.pattern.permute.xlu0 3
  %825 = vperm.xlu0 %824, %v105
  %v826 = vpop.permute.xlu0 %825
  %828 = vset.pattern.permute.xlu0 3
  %829 = vperm.xlu0 %828, %v106
  %v830 = vpop.permute.xlu0 %829
  %v832 = vmul.f32 %v822, %v826
  %v833 = vmul.f32 %v823, %v830
  %834 = vset.pattern.permute.xlu0 10
  %835 = vperm.xlu0 %834, %v105
  %v836 = vpop.permute.xlu0 %835
  %838 = vset.pattern.permute.xlu0 10
  %839 = vperm.xlu0 %838, %v106
  %v840 = vpop.permute.xlu0 %839
  %v842 = vadd.f32 %v832, %v836
  %v843 = vadd.f32 %v833, %v840
  %v844 = vadd.f32 %v842, %v843
  %v845 = vlaneseq
  %v846 = vand.u32 %v845, 127
  %vm847 = vcmp.lt.s32.totalorder %v846, 0
  %v848 = vsub.s32 0, %v846
  %v849 = vsel %vm847, %v848, %v846
  %v850 = vmul.u32.u64.compose %v849, 3817748708
  %v851 = vextract.low.u32 %v850
  %v852 = vextract.high.u32 %v850
  %v853 = vshrl.u32 %v852, 3
  %v854 = vmul.u32 %v853, 9
  %v855 = vsub.s32 %v849, %v854
  %v856 = vsub.s32 0, %v855
  %v857 = vsel %vm847, %v856, %v855
  %vm858 = vcmp.ne.s32.totalorder %v857, 0
  %vm859 = vcmp.lt.s32.totalorder %v857, 0
  %vm860 = vmand %vm859, %vm858
  %v861 = vadd.s32 %v857, 9
  %v862 = vsel %vm860, %v861, %v857
  %vm863 = vcmp.eq.s32.totalorder %v862, 4
  %v864 = vsel %vm863, %v844, 0.0
  %s865 = scalar_lea.vmem %s1, 64
  %v866 = vld [vmem:[%s865] sm:$0xff]
  %v867 = vld [vmem:[%s865 + $0x8] sm:$0xff]
  %v869 = vsel %vm21, %v866, 0
  %v872 = vsel %vm21, %v867, 0
  %874 = vmatprep.subr.mxu0 0.0
  %875 = vmatpush1.msra.mxu0 %v864
  %876 = vmatprep.subr.mxu0 0.0
  %877 = vmatpush1.msra.mxu0 0.0
  %878 = vmatprep.subr.mxu0 0.0
  %879 = vmatpush1.msra.mxu0 0.0
  %880 = vmatprep.subr.mxu0 0.0
  %881 = vmatpush1.msra.mxu0 0.0
  %882 = vmatprep.subr.mxu0 0.0
  %883 = vmatpush1.msra.mxu0 0.0
  %884 = vmatprep.subr.mxu0 0.0
  %885 = vmatpush1.msra.mxu0 0.0
  %886 = vmatprep.subr.mxu0 0.0
  %887 = vmatpush1.msra.mxu0 0.0
  %888 = vmatprep.subr.mxu0 0.0
  %889 = vmatpush1.msra.mxu0 0.0
  %890 = vmatprep.subr.mxu0 0.0
  %891 = vmatpush1.msra.mxu0 0.0
  %892 = vmatprep.subr.mxu0 0.0
  %893 = vmatpush1.msra.mxu0 0.0
  %894 = vmatprep.subr.mxu0 0.0
  %895 = vmatpush1.msra.mxu0 0.0
  %896 = vmatprep.subr.mxu0 0.0
  %897 = vmatpush1.msra.mxu0 0.0
  %898 = vmatprep.subr.mxu0 0.0
  %899 = vmatpush1.msra.mxu0 0.0
  %900 = vmatprep.subr.mxu0 0.0
  %901 = vmatpush1.msra.mxu0 0.0
  %902 = vmatprep.subr.mxu0 0.0
  %903 = vmatpush1.msra.mxu0 0.0
  %904 = vmatprep.subr.mxu0 0.0
  %905 = vmatpush1.msra.mxu0 0.0
  %906 = vmatprep.subr.mxu0 0.0
  %907 = vmatpush1.msra.mxu0 0.0
  %908 = vmatprep.subr.mxu0 0.0
  %909 = vmatpush1.msra.mxu0 0.0
  %910 = vmatprep.subr.mxu0 0.0
  %911 = vmatpush1.msra.mxu0 0.0
  %912 = vmatprep.subr.mxu0 0.0
  %913 = vmatpush1.msra.mxu0 0.0
  %914 = vmatprep.subr.mxu0 0.0
  %915 = vmatpush1.msra.mxu0 0.0
  %916 = vmatprep.subr.mxu0 0.0
  %917 = vmatpush1.msra.mxu0 0.0
  %918 = vmatprep.subr.mxu0 0.0
  %919 = vmatpush1.msra.mxu0 0.0
  %920 = vmatprep.subr.mxu0 0.0
  %921 = vmatpush1.msra.mxu0 0.0
  %922 = vmatprep.subr.mxu0 0.0
  %923 = vmatpush1.msra.mxu0 0.0
  %924 = vmatprep.subr.mxu0 0.0
  %925 = vmatpush1.msra.mxu0 0.0
  %926 = vmatprep.subr.mxu0 0.0
  %927 = vmatpush1.msra.mxu0 0.0
  %928 = vmatprep.subr.mxu0 0.0
  %929 = vmatpush1.msra.mxu0 0.0
  %930 = vmatprep.subr.mxu0 0.0
  %931 = vmatpush1.msra.mxu0 0.0
  %932 = vmatprep.subr.mxu0 0.0
  %933 = vmatpush1.msra.mxu0 0.0
  %934 = vmatprep.subr.mxu0 0.0
  %935 = vmatpush1.msra.mxu0 0.0
  %936 = vmatprep.subr.mxu0 0.0
  %937 = vmatpush1.msra.mxu0 0.0
  %938 = vmatprep.mubr.f32.mxu0 0.0
  %939 = vmatmul.mubr.f32.gmra.mrb[0].mxu0 %v869
  %v940 = vpop.f32.mrb[0].mxu0
  %v941 = vadd.f32 0.0, %v940
  %v942 = vpop.f32.mrb[0].mxu0
  %943 = vmatprep.mubr.f32.mxu0 0.0
  %944 = vmatmul.mubr.f32.gmra.mrb[0].mxu0 %v872
  %v945 = vpop.f32.mrb[0].mxu0
  %v946 = vadd.f32 0.0, %v945
  %v947 = vpop.f32.mrb[0].mxu0
  %948 = vdwg.mxu0
  %v949 = vsel %vm792, %v941, 0.0
  %950 = vadd.xlane.f32.xlu0 %v949
  %v951 = vpop.xlane.xlu0 %950
  %v952 = vsel %vm792, %v946, 0.0
  %953 = vadd.xlane.f32.xlu0 %v952
  %v954 = vpop.xlane.xlu0 %953
  %v955 = vmul.f32 %v951, %v799
  %v956 = vmul.f32 %v954, %v799
  %v957 = vmul.f32 %v941, %v941
  %v958 = vmul.f32 %v946, %v946
  %v959 = vsel %vm792, %v957, 0.0
  %960 = vadd.xlane.f32.xlu0 %v959
  %v961 = vpop.xlane.xlu0 %960
  %v962 = vsel %vm792, %v958, 0.0
  %963 = vadd.xlane.f32.xlu0 %v962
  %v964 = vpop.xlane.xlu0 %963
  %v965 = vmul.f32 %v961, %v799
  %v966 = vmul.f32 %v964, %v799
  %v967 = vmul.f32 %v955, %v955
  %v968 = vmul.f32 %v956, %v956
  %v969 = vsub.f32 %v965, %v967
  %v970 = vsub.f32 %v966, %v968
  %v971 = vsub.f32 %v941, %v955
  %v972 = vsub.f32 %v946, %v956
  %v973 = vadd.f32 %v969, 1e-05
  %v974 = vadd.f32 %v970, 1e-05
  %v975 = vrsqrt.pop %v973
  %v976 = vrsqrt.pop %v974
  %v977 = vmul.f32 %v971, %v975
  %v978 = vmul.f32 %v972, %v976
  %979 = vset.pattern.permute.xlu0 4
  %980 = vperm.xlu0 %979, %v105
  %v981 = vpop.permute.xlu0 %980
  %983 = vset.pattern.permute.xlu0 4
  %984 = vperm.xlu0 %983, %v106
  %v985 = vpop.permute.xlu0 %984
  %v987 = vmul.f32 %v977, %v981
  %v988 = vmul.f32 %v978, %v985
  %989 = vset.pattern.permute.xlu0 11
  %990 = vperm.xlu0 %989, %v105
  %v991 = vpop.permute.xlu0 %990
  %993 = vset.pattern.permute.xlu0 11
  %994 = vperm.xlu0 %993, %v106
  %v995 = vpop.permute.xlu0 %994
  %v997 = vadd.f32 %v987, %v991
  %v998 = vadd.f32 %v988, %v995
  %v999 = vrcp.pop %v998
  %v1000 = vmul.f32 %v998, %v999
  %v1001 = vsub.f32 2.0, %v1000
  %v1002 = vmul.f32 %v999, %v1001
  %v1003 = vmul.f32 %v997, %v1002
  %v1004 = vsel %vm863, %v1003, 0.0
  %s1005 = scalar_lea.vmem %s1, 80
  %v1006 = vld [vmem:[%s1005] sm:$0xff]
  %v1007 = vld [vmem:[%s1005 + $0x8] sm:$0xff]
  %v1009 = vsel %vm21, %v1006, 0
  %v1012 = vsel %vm21, %v1007, 0
  %1014 = vmatprep.subr.mxu0 0.0
  %1015 = vmatpush1.msra.mxu0 %v1004
  %1016 = vmatprep.subr.mxu0 0.0
  %1017 = vmatpush1.msra.mxu0 0.0
  %1018 = vmatprep.subr.mxu0 0.0
  %1019 = vmatpush1.msra.mxu0 0.0
  %1020 = vmatprep.subr.mxu0 0.0
  %1021 = vmatpush1.msra.mxu0 0.0
  %1022 = vmatprep.subr.mxu0 0.0
  %1023 = vmatpush1.msra.mxu0 0.0
  %1024 = vmatprep.subr.mxu0 0.0
  %1025 = vmatpush1.msra.mxu0 0.0
  %1026 = vmatprep.subr.mxu0 0.0
  %1027 = vmatpush1.msra.mxu0 0.0
  %1028 = vmatprep.subr.mxu0 0.0
  %1029 = vmatpush1.msra.mxu0 0.0
  %1030 = vmatprep.subr.mxu0 0.0
  %1031 = vmatpush1.msra.mxu0 0.0
  %1032 = vmatprep.subr.mxu0 0.0
  %1033 = vmatpush1.msra.mxu0 0.0
  %1034 = vmatprep.subr.mxu0 0.0
  %1035 = vmatpush1.msra.mxu0 0.0
  %1036 = vmatprep.subr.mxu0 0.0
  %1037 = vmatpush1.msra.mxu0 0.0
  %1038 = vmatprep.subr.mxu0 0.0
  %1039 = vmatpush1.msra.mxu0 0.0
  %1040 = vmatprep.subr.mxu0 0.0
  %1041 = vmatpush1.msra.mxu0 0.0
  %1042 = vmatprep.subr.mxu0 0.0
  %1043 = vmatpush1.msra.mxu0 0.0
  %1044 = vmatprep.subr.mxu0 0.0
  %1045 = vmatpush1.msra.mxu0 0.0
  %1046 = vmatprep.subr.mxu0 0.0
  %1047 = vmatpush1.msra.mxu0 0.0
  %1048 = vmatprep.subr.mxu0 0.0
  %1049 = vmatpush1.msra.mxu0 0.0
  %1050 = vmatprep.subr.mxu0 0.0
  %1051 = vmatpush1.msra.mxu0 0.0
  %1052 = vmatprep.subr.mxu0 0.0
  %1053 = vmatpush1.msra.mxu0 0.0
  %1054 = vmatprep.subr.mxu0 0.0
  %1055 = vmatpush1.msra.mxu0 0.0
  %1056 = vmatprep.subr.mxu0 0.0
  %1057 = vmatpush1.msra.mxu0 0.0
  %1058 = vmatprep.subr.mxu0 0.0
  %1059 = vmatpush1.msra.mxu0 0.0
  %1060 = vmatprep.subr.mxu0 0.0
  %1061 = vmatpush1.msra.mxu0 0.0
  %1062 = vmatprep.subr.mxu0 0.0
  %1063 = vmatpush1.msra.mxu0 0.0
  %1064 = vmatprep.subr.mxu0 0.0
  %1065 = vmatpush1.msra.mxu0 0.0
  %1066 = vmatprep.subr.mxu0 0.0
  %1067 = vmatpush1.msra.mxu0 0.0
  %1068 = vmatprep.subr.mxu0 0.0
  %1069 = vmatpush1.msra.mxu0 0.0
  %1070 = vmatprep.subr.mxu0 0.0
  %1071 = vmatpush1.msra.mxu0 0.0
  %1072 = vmatprep.subr.mxu0 0.0
  %1073 = vmatpush1.msra.mxu0 0.0
  %1074 = vmatprep.subr.mxu0 0.0
  %1075 = vmatpush1.msra.mxu0 0.0
  %1076 = vmatprep.subr.mxu0 0.0
  %1077 = vmatpush1.msra.mxu0 0.0
  %1078 = vmatprep.mubr.f32.mxu0 0.0
  %1079 = vmatmul.mubr.f32.gmra.mrb[0].mxu0 %v1009
  %v1080 = vpop.f32.mrb[0].mxu0
  %v1081 = vadd.f32 0.0, %v1080
  %v1082 = vpop.f32.mrb[0].mxu0
  %1083 = vmatprep.mubr.f32.mxu0 0.0
  %1084 = vmatmul.mubr.f32.gmra.mrb[0].mxu0 %v1012
  %v1085 = vpop.f32.mrb[0].mxu0
  %v1086 = vadd.f32 0.0, %v1085
  %v1087 = vpop.f32.mrb[0].mxu0
  %1088 = vdwg.mxu0
  %v1089 = vsel %vm792, %v1081, 0.0
  %1090 = vadd.xlane.f32.xlu0 %v1089
  %v1091 = vpop.xlane.xlu0 %1090
  %v1092 = vsel %vm792, %v1086, 0.0
  %1093 = vadd.xlane.f32.xlu0 %v1092
  %v1094 = vpop.xlane.xlu0 %1093
  %v1095 = vmul.f32 %v1091, %v799
  %v1096 = vmul.f32 %v1094, %v799
  %v1097 = vmul.f32 %v1081, %v1081
  %v1098 = vmul.f32 %v1086, %v1086
  %v1099 = vsel %vm792, %v1097, 0.0
  %1100 = vadd.xlane.f32.xlu0 %v1099
  %v1101 = vpop.xlane.xlu0 %1100
  %v1102 = vsel %vm792, %v1098, 0.0
  %1103 = vadd.xlane.f32.xlu0 %v1102
  %v1104 = vpop.xlane.xlu0 %1103
  %v1105 = vmul.f32 %v1101, %v799
  %v1106 = vmul.f32 %v1104, %v799
  %v1107 = vmul.f32 %v1095, %v1095
  %v1108 = vmul.f32 %v1096, %v1096
  %v1109 = vsub.f32 %v1105, %v1107
  %v1110 = vsub.f32 %v1106, %v1108
  %v1111 = vsub.f32 %v1081, %v1095
  %v1112 = vsub.f32 %v1086, %v1096
  %v1113 = vadd.f32 %v1109, 1e-05
  %v1114 = vadd.f32 %v1110, 1e-05
  %v1115 = vrsqrt.pop %v1113
  %v1116 = vrsqrt.pop %v1114
  %v1117 = vmul.f32 %v1111, %v1115
  %v1118 = vmul.f32 %v1112, %v1116
  %1119 = vset.pattern.permute.xlu0 5
  %1120 = vperm.xlu0 %1119, %v105
  %v1121 = vpop.permute.xlu0 %1120
  %1123 = vset.pattern.permute.xlu0 5
  %1124 = vperm.xlu0 %1123, %v106
  %v1125 = vpop.permute.xlu0 %1124
  %v1127 = vmul.f32 %v1117, %v1121
  %v1128 = vmul.f32 %v1118, %v1125
  %1129 = vset.pattern.permute.xlu0 12
  %1130 = vperm.xlu0 %1129, %v105
  %v1131 = vpop.permute.xlu0 %1130
  %1133 = vset.pattern.permute.xlu0 12
  %1134 = vperm.xlu0 %1133, %v106
  %v1135 = vpop.permute.xlu0 %1134
  %v1137 = vadd.f32 %v1127, %v1131
  %v1138 = vadd.f32 %v1128, %v1135
  %v1139 = vmul.f32 %v1137, %v1138
  %v1140 = vsel %vm863, %v1139, 0.0
  %s1141 = scalar_lea.vmem %s1, 96
  %v1142 = vld [vmem:[%s1141] sm:$0xff]
  %v1143 = vld [vmem:[%s1141 + $0x8] sm:$0xff]
  %1144 = vset.pattern.permute.xlu0 20
  %1145 = vperm.xlu0 %1144, %v105
  %v1146 = vpop.permute.xlu0 %1145
  %1148 = vset.pattern.permute.xlu0 20
  %1149 = vperm.xlu0 %1148, %v106
  %v1150 = vpop.permute.xlu0 %1149
  %v1153 = vsel %vm21, %v1142, 0
  %v1156 = vsel %vm21, %v1143, 0
  %1158 = vmatprep.subr.mxu0 0.0
  %1159 = vmatpush1.msra.mxu0 %v1140
  %1160 = vmatprep.subr.mxu0 0.0
  %1161 = vmatpush1.msra.mxu0 0.0
  %1162 = vmatprep.subr.mxu0 0.0
  %1163 = vmatpush1.msra.mxu0 0.0
  %1164 = vmatprep.subr.mxu0 0.0
  %1165 = vmatpush1.msra.mxu0 0.0
  %1166 = vmatprep.subr.mxu0 0.0
  %1167 = vmatpush1.msra.mxu0 0.0
  %1168 = vmatprep.subr.mxu0 0.0
  %1169 = vmatpush1.msra.mxu0 0.0
  %1170 = vmatprep.subr.mxu0 0.0
  %1171 = vmatpush1.msra.mxu0 0.0
  %1172 = vmatprep.subr.mxu0 0.0
  %1173 = vmatpush1.msra.mxu0 0.0
  %1174 = vmatprep.subr.mxu0 0.0
  %1175 = vmatpush1.msra.mxu0 0.0
  %1176 = vmatprep.subr.mxu0 0.0
  %1177 = vmatpush1.msra.mxu0 0.0
  %1178 = vmatprep.subr.mxu0 0.0
  %1179 = vmatpush1.msra.mxu0 0.0
  %1180 = vmatprep.subr.mxu0 0.0
  %1181 = vmatpush1.msra.mxu0 0.0
  %1182 = vmatprep.subr.mxu0 0.0
  %1183 = vmatpush1.msra.mxu0 0.0
  %1184 = vmatprep.subr.mxu0 0.0
  %1185 = vmatpush1.msra.mxu0 0.0
  %1186 = vmatprep.subr.mxu0 0.0
  %1187 = vmatpush1.msra.mxu0 0.0
  %1188 = vmatprep.subr.mxu0 0.0
  %1189 = vmatpush1.msra.mxu0 0.0
  %1190 = vmatprep.subr.mxu0 0.0
  %1191 = vmatpush1.msra.mxu0 0.0
  %1192 = vmatprep.subr.mxu0 0.0
  %1193 = vmatpush1.msra.mxu0 0.0
  %1194 = vmatprep.subr.mxu0 0.0
  %1195 = vmatpush1.msra.mxu0 0.0
  %1196 = vmatprep.subr.mxu0 0.0
  %1197 = vmatpush1.msra.mxu0 0.0
  %1198 = vmatprep.subr.mxu0 0.0
  %1199 = vmatpush1.msra.mxu0 0.0
  %1200 = vmatprep.subr.mxu0 0.0
  %1201 = vmatpush1.msra.mxu0 0.0
  %1202 = vmatprep.subr.mxu0 0.0
  %1203 = vmatpush1.msra.mxu0 0.0
  %1204 = vmatprep.subr.mxu0 0.0
  %1205 = vmatpush1.msra.mxu0 0.0
  %1206 = vmatprep.subr.mxu0 0.0
  %1207 = vmatpush1.msra.mxu0 0.0
  %1208 = vmatprep.subr.mxu0 0.0
  %1209 = vmatpush1.msra.mxu0 0.0
  %1210 = vmatprep.subr.mxu0 0.0
  %1211 = vmatpush1.msra.mxu0 0.0
  %1212 = vmatprep.subr.mxu0 0.0
  %1213 = vmatpush1.msra.mxu0 0.0
  %1214 = vmatprep.subr.mxu0 0.0
  %1215 = vmatpush1.msra.mxu0 0.0
  %1216 = vmatprep.subr.mxu0 0.0
  %1217 = vmatpush1.msra.mxu0 0.0
  %1218 = vmatprep.subr.mxu0 0.0
  %1219 = vmatpush1.msra.mxu0 0.0
  %1220 = vmatprep.subr.mxu0 0.0
  %1221 = vmatpush1.msra.mxu0 0.0
  %1222 = vmatprep.mubr.f32.mxu0 0.0
  %1223 = vmatmul.mubr.f32.gmra.mrb[0].mxu0 %v1153
  %v1224 = vpop.f32.mrb[0].mxu0
  %v1225 = vadd.f32 %v1146, %v1224
  %v1226 = vpop.f32.mrb[0].mxu0
  %1227 = vmatprep.mubr.f32.mxu0 0.0
  %1228 = vmatmul.mubr.f32.gmra.mrb[0].mxu0 %v1156
  %v1229 = vpop.f32.mrb[0].mxu0
  %v1230 = vadd.f32 %v1150, %v1229
  %v1231 = vpop.f32.mrb[0].mxu0
  %1232 = vdwg.mxu0
  %v1233 = vsub.f32 %v1225, %v1230
  %1234 = vst.msk [vmem:[%s4] sm:$0xff] %vm792, %v1233
  // Predicated region
  $region18: #{fwd.1} parent=0 // pred_check
    _
  $region19: #{fwd.1} parent=0 // pred_check_branch
    %1236 = sbr.rel (0) target = $region21
  $region20: #{fwd.1} parent=0 // pred_region
    _
  $region21: #{fwd.1} parent=0 // pred_fallthru
    _
  // Predicated region
  $region22: #{fwd.1} parent=0 // pred_check
    _
  $region23: #{fwd.1} parent=0 // pred_check_branch
    %1238 = sbr.rel (0) target = $region25
  $region24: #{fwd.1} parent=0 // pred_region
    _
  $region25: #{fwd.1} parent=0 // pred_fallthru
    _

</llo_original>
